<compile_context>
chip_gen: v7x
topology: tpu7x:2x2x1
jax: 0.10.0
libtpu: 0.0.40
codegen_flags: <defaults>
</compile_context>

<pallas_src>
import functools
import math

import jax
import jax.numpy as jnp
from jax.experimental import pallas as pl
from jax.experimental.pallas import tpu as pltpu

LANE = 128                    # lane width: feature dims padded to multiples of this
SUBLANE = 8                   # f32 sublane tile: batch / source-length padding
NEG_BIG = -1e30               # finite "-inf" (Python float -> not a captured constant)
COMPUTE_DT = jnp.bfloat16     # MXU operand dtype (accumulation is f32)


def _round_up(x, m):
    return (x + m - 1) // m * m


# ---------------------------------------------------------------------------
# Parameters (PyTorch layouts, weights pre-transposed to (in, out))
# ---------------------------------------------------------------------------
def init_params(key, hidden_size, output_size):
    H, V = hidden_size, output_size
    keys = jax.random.split(key, 11)

    def u(k, shape, fan_in):
        b = 1.0 / math.sqrt(fan_in)
        return jax.random.uniform(k, shape, jnp.float32, -b, b)

    params = {}
    params["embedding"] = jax.random.normal(keys[0], (V, H), jnp.float32)
    # GRU(H -> 2H), torch gate order r,z,n; stored transposed (in, 6H).
    params["w_ih"] = u(keys[1], (H, 6 * H), 2 * H)
    params["b_ih"] = u(keys[2], (1, 6 * H), 2 * H)
    params["w_hh"] = u(keys[3], (2 * H, 6 * H), 2 * H)
    params["b_hh"] = u(keys[4], (1, 6 * H), 2 * H)
    # attn: Linear(2H, 2H)
    params["w_attn"] = u(keys[5], (2 * H, 2 * H), 2 * H)
    params["b_attn"] = u(keys[6], (1, 2 * H), 2 * H)
    # Whc: Linear(4H, H)  (rows [0:2H] multiply rnn_output, [2H:4H] multiply context)
    params["w_whc"] = u(keys[7], (4 * H, H), 4 * H)
    params["b_whc"] = u(keys[8], (1, H), 4 * H)
    # out: Linear(H, V)
    params["w_out"] = u(keys[9], (H, V), H)
    params["b_out"] = u(keys[10], (1, V), H)
    return params


def pack_params(params, hidden_size, output_size):
    """Pack weights into three bf16 slabs (gates / attn+Whc / out) + f32 biases."""
    H, V = hidden_size, output_size
    DP = _round_up(2 * H, LANE)
    VP = _round_up(V, LANE)

    # GRU gate weights: rows [0:DP]=w_ih (H real rows), [DP:2DP]=w_hh (2H real rows).
    # Each gate (r,z,n) occupies its own lane-aligned DP-wide column slab.
    wg = jnp.zeros((2 * DP, 3 * DP), jnp.float32)
    bg = jnp.zeros((2, 3 * DP), jnp.float32)
    for g in range(3):
        wg = wg.at[0:H, g * DP:g * DP + 2 * H].set(
            params["w_ih"][:, g * 2 * H:(g + 1) * 2 * H])
        wg = wg.at[DP:DP + 2 * H, g * DP:g * DP + 2 * H].set(
            params["w_hh"][:, g * 2 * H:(g + 1) * 2 * H])
    # r/z biases pre-summed onto the gi side; n gate keeps b_ih / b_hh separate.
    for g in range(2):
        bg = bg.at[0, g * DP:g * DP + 2 * H].set(
            params["b_ih"][0, g * 2 * H:(g + 1) * 2 * H]
            + params["b_hh"][0, g * 2 * H:(g + 1) * 2 * H])
    bg = bg.at[0, 2 * DP:2 * DP + 2 * H].set(params["b_ih"][0, 4 * H:6 * H])
    bg = bg.at[1, 2 * DP:2 * DP + 2 * H].set(params["b_hh"][0, 4 * H:6 * H])

    # attn / Whc weights: rows [0:DP]=w_attn, [DP:2DP]=w_whc(h), [2DP:3DP]=w_whc(ctx).
    wm = jnp.zeros((3 * DP, DP), jnp.float32)
    wm = wm.at[0:2 * H, 0:2 * H].set(params["w_attn"])
    wm = wm.at[DP:DP + 2 * H, 0:H].set(params["w_whc"][0:2 * H, :])
    wm = wm.at[2 * DP:2 * DP + 2 * H, 0:H].set(params["w_whc"][2 * H:4 * H, :])
    bm = jnp.zeros((2, DP), jnp.float32)
    bm = bm.at[0, 0:2 * H].set(params["b_attn"][0])
    bm = bm.at[1, 0:H].set(params["b_whc"][0])

    # output head (own slab so it can be tiled over vocab independently).
    wo = jnp.zeros((DP, VP), jnp.float32)
    wo = wo.at[0:H, 0:V].set(params["w_out"])
    bo = jnp.full((1, VP), NEG_BIG, jnp.float32)   # padded vocab -> -1e30 logits
    bo = bo.at[0, 0:V].set(params["b_out"][0])

    return {
        "embedding": params["embedding"],
        "w_gates": wg.astype(COMPUTE_DT),
        "w_misc": wm.astype(COMPUTE_DT),
        "w_out": wo.astype(COMPUTE_DT),
        "b_gates": bg,
        "b_misc": bm,
        "b_out": bo,
    }


# ---------------------------------------------------------------------------
# Fused T-step decode kernel (grid=(T,), resident weights, VMEM hidden carry)
# ---------------------------------------------------------------------------
def _build_decoder_call(T, BP, SP, DP, VP):
    def kernel(x_ref, h0_ref, enc_ref, maskb_ref,
               wg_ref, wm_ref, wo_ref, bg_ref, bm_ref, bo_ref,
               logp_ref, attn_ref, hout_ref, h_carry):
        t = pl.program_id(0)

        @pl.when(t == 0)
        def _():
            h_carry[...] = h0_ref[...]

        h = h_carry[...]                                   # (BP, DP) f32
        x16 = x_ref[...].astype(COMPUTE_DT)                # (BP, DP) bf16
        h16 = h.astype(COMPUTE_DT)

        # ---- GRU cell (torch gate order r, z, n); gates in lane-aligned slabs.
        gi = jnp.dot(x16, wg_ref[0:DP, :],
                     preferred_element_type=jnp.float32) + bg_ref[0:1, :]
        gh = jnp.dot(h16, wg_ref[DP:2 * DP, :],
                     preferred_element_type=jnp.float32) + bg_ref[1:2, :]
        r = jax.nn.sigmoid(gi[:, 0:DP] + gh[:, 0:DP])
        z = jax.nn.sigmoid(gi[:, DP:2 * DP] + gh[:, DP:2 * DP])
        n = jnp.tanh(gi[:, 2 * DP:3 * DP] + r * gh[:, 2 * DP:3 * DP])
        h_new = (1.0 - z) * n + z * h                      # padded lanes stay 0
        h_carry[...] = h_new
        hout_ref[...] = h_new

        h_new16 = h_new.astype(COMPUTE_DT)

        # ---- dot attention: scores/context as VPU multiply + XLU reduce
        #      (SP is tiny -> no per-batch MXU weight pushes).
        attn_h = jnp.dot(h_new16, wm_ref[0:DP, :],
                         preferred_element_type=jnp.float32) + bm_ref[0:1, :]
        enc = enc_ref[...]                                 # (BP, SP, DP) f32, resident
        scores = jnp.sum(attn_h[:, None, :] * enc, axis=-1) + maskb_ref[...]
        m = jnp.max(scores, axis=-1, keepdims=True)
        e = jnp.exp(scores - m)
        denom = jnp.sum(e, axis=-1, keepdims=True)
        attn_w = e * pl.reciprocal(denom, approx=True)     # softmax over S (EUP slot)
        attn_ref[...] = attn_w
        context = jnp.sum(attn_w[:, :, None] * enc, axis=1)   # (BP, DP)

        # ---- output head: one K = 2*DP Whc contraction, then out + log_softmax.
        hc = jnp.concatenate([h_new, context], axis=-1).astype(COMPUTE_DT)
        hid = jnp.tanh(jnp.dot(hc, wm_ref[DP:3 * DP, :],
                               preferred_element_type=jnp.float32)
                       + bm_ref[1:2, :])
        logits = jnp.dot(hid.astype(COMPUTE_DT), wo_ref[...],
                         preferred_element_type=jnp.float32) + bo_ref[...]
        lm = jnp.max(logits, axis=-1, keepdims=True)
        lse = jnp.log(jnp.sum(jnp.exp(logits - lm), axis=-1, keepdims=True)) + lm
        logp_ref[...] = logits - lse

    grid_spec = pltpu.PrefetchScalarGridSpec(
        num_scalar_prefetch=0,
        grid=(T,),
        in_specs=[
            pl.BlockSpec((None, BP, DP), lambda t: (t, 0, 0)),   # x_emb per step
            pl.BlockSpec((BP, DP), lambda t: (0, 0)),            # h0 (resident)
            pl.BlockSpec((BP, SP, DP), lambda t: (0, 0, 0)),     # enc (resident)
            pl.BlockSpec((BP, SP), lambda t: (0, 0)),            # additive mask bias
            pl.BlockSpec((2 * DP, 3 * DP), lambda t: (0, 0)),    # w_gates (resident)
            pl.BlockSpec((3 * DP, DP), lambda t: (0, 0)),        # w_misc  (resident)
            pl.BlockSpec((DP, VP), lambda t: (0, 0)),            # w_out   (resident)
            pl.BlockSpec((2, 3 * DP), lambda t: (0, 0)),         # b_gates
            pl.BlockSpec((2, DP), lambda t: (0, 0)),             # b_misc
            pl.BlockSpec((1, VP), lambda t: (0, 0)),             # b_out
        ],
        out_specs=(
            pl.BlockSpec((None, BP, VP), lambda t: (t, 0, 0)),   # log-probs per step
            pl.BlockSpec((None, BP, SP), lambda t: (t, 0, 0)),   # attn weights per step
            pl.BlockSpec((BP, DP), lambda t: (0, 0)),            # final hidden
        ),
        scratch_shapes=[pltpu.VMEM((BP, DP), jnp.float32)],      # hidden carry
    )
    out_shape = (
        jax.ShapeDtypeStruct((T, BP, VP), jnp.float32),
        jax.ShapeDtypeStruct((T, BP, SP), jnp.float32),
        jax.ShapeDtypeStruct((BP, DP), jnp.float32),
    )
    return pl.pallas_call(
        kernel,
        out_shape=out_shape,
        grid_spec=grid_spec,
        compiler_params=pltpu.CompilerParams(
            dimension_semantics=("arbitrary",)),   # steps are sequentially dependent
    )


@functools.partial(jax.jit, static_argnames=("hidden_size", "output_size"))
def attn_decoder_decode(packed, word_inputs, hidden, encoder_outputs,
                        last_hidden, mask, *, hidden_size, output_size):
    """Run T fused, teacher-forced decode steps (T == 1 reproduces forward())."""
    if hidden is None:
        hidden = last_hidden
    T, B = word_inputs.shape
    H = hidden_size
    S = encoder_outputs.shape[1]
    V = output_size

    DP = _round_up(2 * H, LANE)        # padded feature width (2H -> 128)
    VP = _round_up(V, LANE)            # padded vocab width
    SP = _round_up(S, SUBLANE)         # source length padded to sublane tile only
    BP = _round_up(B, SUBLANE)         # padded batch

    # One gather for all T steps (dropout == identity at inference).
    x_all = packed["embedding"][word_inputs]                              # (T, B, H)
    x_p = jnp.zeros((T, BP, DP), jnp.float32).at[:, :B, :H].set(x_all)
    h0_p = jnp.zeros((BP, DP), jnp.float32).at[:B, :2 * H].set(hidden[0])
    enc_p = jnp.zeros((BP, SP, DP), jnp.float32).at[:B, :S, :2 * H].set(
        encoder_outputs)
    maskb = jnp.full((BP, SP), NEG_BIG, jnp.float32)
    maskb = maskb.at[:B, :S].set(
        jnp.where(mask[:, :S].astype(jnp.bool_), 0.0, NEG_BIG))

    call = _build_decoder_call(T, BP, SP, DP, VP)
    logp_p, attn_p, h_fin_p = call(
        x_p, h0_p, enc_p, maskb,
        packed["w_gates"], packed["w_misc"], packed["w_out"],
        packed["b_gates"], packed["b_misc"], packed["b_out"])

    logp = logp_p[:, :B, :V]                          # (T, B, V)
    attn = attn_p[:, :B, :S]                          # (T, B, S)
    h_fin = h_fin_p[:B, :2 * H].reshape(1, B, 2 * H)  # (1, B, 2H)
    return logp, h_fin, attn


def attn_decoder_forward(packed, word_input, hidden, encoder_outputs,
                         last_hidden, mask, *, hidden_size, output_size):
    """Single decode step with the exact semantics of AttnDecoderRNN.forward."""
    B = word_input.shape[0]
    S = encoder_outputs.shape[1]
    logp, h_new, attn = attn_decoder_decode(
        packed, word_input[:, 0][None, :], hidden, encoder_outputs,
        last_hidden, mask, hidden_size=hidden_size, output_size=output_size)
    return (logp.reshape(1, B, output_size),          # output.view(1, B, -1)
            h_new,                                    # hidden (1, B, 2H)
            attn.reshape(B, 1, S))                    # attn_weights (B, 1, S)


# ---------------------------------------------------------------------------
# Pure-JAX f32 reference (mirrors the PyTorch module, dropout = identity)
# ---------------------------------------------------------------------------
def reference_forward(params, word_input, hidden, encoder_outputs, last_hidden, mask):
    if hidden is None:
        hidden = last_hidden
    B = word_input.shape[0]
    h = hidden[0]                                      # (B, 2H)
    D = h.shape[1]
    x = params["embedding"][word_input[:, 0]]          # (B, H)
    gi = x @ params["w_ih"] + params["b_ih"][0]
    gh = h @ params["w_hh"] + params["b_hh"][0]
    r = jax.nn.sigmoid(gi[:, 0:D] + gh[:, 0:D])
    z = jax.nn.sigmoid(gi[:, D:2 * D] + gh[:, D:2 * D])
    n = jnp.tanh(gi[:, 2 * D:3 * D] + r * gh[:, 2 * D:3 * D])
    h_new = (1.0 - z) * n + z * h
    attn_h = h_new @ params["w_attn"] + params["b_attn"][0]
    scores = jnp.einsum("bd,bsd->bs", attn_h, encoder_outputs)
    scores = jnp.where(mask[:, :scores.shape[1]] != 0, scores, -jnp.inf)
    attn_w = jax.nn.softmax(scores, axis=-1)
    context = jnp.einsum("bs,bsd->bd", attn_w, encoder_outputs)
    hid = jnp.tanh(jnp.concatenate([h_new, context], axis=-1) @ params["w_whc"]
                   + params["b_whc"][0])
    logits = hid @ params["w_out"] + params["b_out"][0]
    logp = jax.nn.log_softmax(logits, axis=-1)
    return (logp.reshape(1, B, -1), h_new.reshape(1, B, -1),
            attn_w.reshape(B, 1, -1))


if __name__ == "__main__":
    H, V, B, S = 32, 64, 2, 8      # hidden_size, output_size(vocab), batch, enc seq len
    key = jax.random.PRNGKey(0)
    kp, k1, k2, k3, k4 = jax.random.split(key, 5)

    params = init_params(kp, H, V)
    packed = pack_params(params, H, V)                                   # done once

    word_input = jax.random.randint(k1, (B, 1), 0, V)                    # (B, 1) tokens
    encoder_outputs = jax.random.normal(k2, (B, S, 2 * H), jnp.float32)  # (B, S, 2H)
    last_hidden = jax.random.normal(k3, (1, B, 2 * H), jnp.float32)      # (1, B, 2H)
    mask = jnp.ones((B, S), jnp.float32).at[1, S - 2:].set(0.0)          # pad mask

    # --- single step (module forward semantics, T == 1) ---
    logp, hidden_new, attn_w = attn_decoder_forward(
        packed, word_input, None, encoder_outputs, last_hidden, mask,
        hidden_size=H, output_size=V)
    jax.block_until_ready((logp, hidden_new, attn_w))

    assert logp.shape == (1, B, V)
    assert hidden_new.shape == (1, B, 2 * H)
    assert attn_w.shape == (B, 1, S)
    assert bool(jnp.isfinite(logp).all()) and bool(jnp.isfinite(attn_w).all())

    lp_r, h_r, aw_r = reference_forward(
        params, word_input, None, encoder_outputs, last_hidden, mask)
    assert float(jnp.max(jnp.abs(logp - lp_r))) < 0.15
    assert float(jnp.max(jnp.abs(hidden_new - h_r))) < 0.08
    assert float(jnp.max(jnp.abs(attn_w - aw_r))) < 0.08

    # --- fused multi-step decode (grid=(T,), weights resident, hidden in VMEM) ---
    T = 4
    word_inputs = jax.random.randint(k4, (T, B), 0, V)                   # (T, B) tokens
    logp_all, h_fin, attn_all = attn_decoder_decode(
        packed, word_inputs, None, encoder_outputs, last_hidden, mask,
        hidden_size=H, output_size=V)
    jax.block_until_ready((logp_all, h_fin, attn_all))
    assert logp_all.shape == (T, B, V) and attn_all.shape == (T, B, S)
    assert h_fin.shape == (1, B, 2 * H)

    h_ref = None
    for t in range(T):
        lp_r, h_ref, aw_r = reference_forward(
            params, word_inputs[t][:, None], h_ref, encoder_outputs,
            last_hidden, mask)
        assert float(jnp.max(jnp.abs(logp_all[t] - lp_r[0]))) < 0.15
        assert float(jnp.max(jnp.abs(attn_all[t] - aw_r[:, 0, :]))) < 0.08
    assert float(jnp.max(jnp.abs(h_fin - h_ref))) < 0.08

    print("KERNEL_OK")
</pallas_src>

<mosaic_0001>
module attributes {stable_mosaic.version = 11 : i64} {
  func.func @kernel(%arg0: i32, %arg1: memref<1x8x128xf32, #tpu.memory_space<vmem>>, %arg2: memref<8x128xf32, #tpu.memory_space<vmem>>, %arg3: memref<8x8x128xf32, #tpu.memory_space<vmem>>, %arg4: memref<8x8xf32, #tpu.memory_space<vmem>>, %arg5: memref<256x384xbf16, #tpu.memory_space<vmem>>, %arg6: memref<384x128xbf16, #tpu.memory_space<vmem>>, %arg7: memref<128x128xbf16, #tpu.memory_space<vmem>>, %arg8: memref<2x384xf32, #tpu.memory_space<vmem>>, %arg9: memref<2x128xf32, #tpu.memory_space<vmem>>, %arg10: memref<1x128xf32, #tpu.memory_space<vmem>>, %arg11: memref<1x8x128xf32, #tpu.memory_space<vmem>>, %arg12: memref<1x8x8xf32, #tpu.memory_space<vmem>>, %arg13: memref<8x128xf32, #tpu.memory_space<vmem>>, %arg14: memref<8x128xf32, #tpu.memory_space<vmem>>) attributes {dimension_semantics = [#tpu.dimension_semantics<arbitrary>], iteration_bounds = array<i64: 1>, scalar_prefetch = 0 : i64, scratch_operands = 1 : i64, tpu.core_type = #tpu.core_type<tc>, window_params = [{transform_indices = @transform_0, window_bounds = array<i64: 1, 8, 128>}, {pipeline_mode = #tpu.pipeline_mode<synchronous>, transform_indices = @transform_1, window_bounds = array<i64: 8, 128>}, {pipeline_mode = #tpu.pipeline_mode<synchronous>, transform_indices = @transform_2, window_bounds = array<i64: 8, 8, 128>}, {pipeline_mode = #tpu.pipeline_mode<synchronous>, transform_indices = @transform_3, window_bounds = array<i64: 8, 8>}, {pipeline_mode = #tpu.pipeline_mode<synchronous>, transform_indices = @transform_4, window_bounds = array<i64: 256, 384>}, {pipeline_mode = #tpu.pipeline_mode<synchronous>, transform_indices = @transform_5, window_bounds = array<i64: 384, 128>}, {pipeline_mode = #tpu.pipeline_mode<synchronous>, transform_indices = @transform_6, window_bounds = array<i64: 128, 128>}, {pipeline_mode = #tpu.pipeline_mode<synchronous>, transform_indices = @transform_7, window_bounds = array<i64: 2, 384>}, {pipeline_mode = #tpu.pipeline_mode<synchronous>, transform_indices = @transform_8, window_bounds = array<i64: 2, 128>}, {pipeline_mode = #tpu.pipeline_mode<synchronous>, transform_indices = @transform_9, window_bounds = array<i64: 1, 128>}, {transform_indices = @transform_10, window_bounds = array<i64: 1, 8, 128>}, {transform_indices = @transform_11, window_bounds = array<i64: 1, 8, 8>}, {pipeline_mode = #tpu.pipeline_mode<synchronous>, transform_indices = @transform_12, window_bounds = array<i64: 8, 128>}]} {
    %c0_i32 = arith.constant 0 : i32
    %0 = arith.cmpi eq, %arg0, %c0_i32 : i32
    %1 = arith.extui %0 : i1 to i32
    %c0_i32_0 = arith.constant 0 : i32
    %2 = arith.cmpi ne, %1, %c0_i32_0 : i32
    scf.if %2 {
      %c0_51 = arith.constant 0 : index
      %c0_52 = arith.constant 0 : index
      %104 = vector.load %arg2[%c0_51, %c0_52] : memref<8x128xf32, #tpu.memory_space<vmem>>, vector<8x128xf32>
      %c0_53 = arith.constant 0 : index
      %c0_54 = arith.constant 0 : index
      %105 = vector.load %arg14[%c0_53, %c0_54] : memref<8x128xf32, #tpu.memory_space<vmem>>, vector<8x128xf32>
      tpu.vector_store %arg14[%c0_53, %c0_54], %104 {strides = array<i32>} : memref<8x128xf32, #tpu.memory_space<vmem>>, vector<8x128xf32>,
    } else {
    }
    %c0 = arith.constant 0 : index
    %c0_1 = arith.constant 0 : index
    %3 = vector.load %arg14[%c0, %c0_1] : memref<8x128xf32, #tpu.memory_space<vmem>>, vector<8x128xf32>
    %c0_2 = arith.constant 0 : index
    %c0_3 = arith.constant 0 : index
    %c0_4 = arith.constant 0 : index
    %4 = vector.load %arg1[%c0_2, %c0_3, %c0_4] : memref<1x8x128xf32, #tpu.memory_space<vmem>>, vector<1x8x128xf32>
    %5 = vector.shape_cast %4 : vector<1x8x128xf32> to vector<8x128xf32>
    %6 = arith.truncf %5 : vector<8x128xf32> to vector<8x128xbf16>
    %7 = arith.truncf %3 : vector<8x128xf32> to vector<8x128xbf16>
    %c0_5 = arith.constant 0 : index
    %c0_6 = arith.constant 0 : index
    %8 = vector.load %arg5[%c0_5, %c0_6] : memref<256x384xbf16, #tpu.memory_space<vmem>>, vector<128x384xbf16>
    %cst = arith.constant dense<0.000000e+00> : vector<8x384xf32>
    %9 = tpu.matmul %6, %8, %cst {dimension_numbers = #tpu.dot_dimension_numbers<[1], [0], [0], [1], [0, 0, 1, 1], [], []>} : vector<8x128xbf16>, vector<128x384xbf16>, vector<8x384xf32> -> vector<8x384xf32>
    %c0_7 = arith.constant 0 : index
    %c0_8 = arith.constant 0 : index
    %10 = vector.load %arg8[%c0_7, %c0_8] : memref<2x384xf32, #tpu.memory_space<vmem>>, vector<1x384xf32>
    %11 = vector.broadcast %10 : vector<1x384xf32> to vector<8x384xf32>
    %12 = arith.addf %9, %11 : vector<8x384xf32>
    %c128 = arith.constant 128 : index
    %c0_9 = arith.constant 0 : index
    %13 = vector.load %arg5[%c128, %c0_9] : memref<256x384xbf16, #tpu.memory_space<vmem>>, vector<128x384xbf16>
    %cst_10 = arith.constant dense<0.000000e+00> : vector<8x384xf32>
    %14 = tpu.matmul %7, %13, %cst_10 {dimension_numbers = #tpu.dot_dimension_numbers<[1], [0], [0], [1], [0, 0, 1, 1], [], []>} : vector<8x128xbf16>, vector<128x384xbf16>, vector<8x384xf32> -> vector<8x384xf32>
    %c1 = arith.constant 1 : index
    %c0_11 = arith.constant 0 : index
    %15 = vector.load %arg8[%c1, %c0_11] : memref<2x384xf32, #tpu.memory_space<vmem>>, vector<1x384xf32>
    %16 = vector.broadcast %15 : vector<1x384xf32> to vector<8x384xf32>
    %17 = arith.addf %14, %16 : vector<8x384xf32>
    %18 = vector.extract_strided_slice %12 {offsets = [0, 0], sizes = [8, 128], strides = [1, 1]} : vector<8x384xf32> to vector<8x128xf32>
    %19 = vector.extract_strided_slice %17 {offsets = [0, 0], sizes = [8, 128], strides = [1, 1]} : vector<8x384xf32> to vector<8x128xf32>
    %20 = arith.addf %18, %19 : vector<8x128xf32>
    %21 = arith.negf %20 : vector<8x128xf32>
    %22 = math.exp %21 : vector<8x128xf32>
    %cst_12 = arith.constant 1.000000e+00 : f32
    %23 = vector.broadcast %cst_12 : f32 to vector<8x128xf32>
    %24 = arith.addf %23, %22 : vector<8x128xf32>
    %25 = arith.divf %23, %24 : vector<8x128xf32>
    %26 = vector.extract_strided_slice %12 {offsets = [0, 128], sizes = [8, 128], strides = [1, 1]} : vector<8x384xf32> to vector<8x128xf32>
    %27 = vector.extract_strided_slice %17 {offsets = [0, 128], sizes = [8, 128], strides = [1, 1]} : vector<8x384xf32> to vector<8x128xf32>
    %28 = arith.addf %26, %27 : vector<8x128xf32>
    %29 = arith.negf %28 : vector<8x128xf32>
    %30 = math.exp %29 : vector<8x128xf32>
    %cst_13 = arith.constant 1.000000e+00 : f32
    %31 = vector.broadcast %cst_13 : f32 to vector<8x128xf32>
    %32 = arith.addf %31, %30 : vector<8x128xf32>
    %33 = arith.divf %31, %32 : vector<8x128xf32>
    %34 = vector.extract_strided_slice %12 {offsets = [0, 256], sizes = [8, 128], strides = [1, 1]} : vector<8x384xf32> to vector<8x128xf32>
    %35 = vector.extract_strided_slice %17 {offsets = [0, 256], sizes = [8, 128], strides = [1, 1]} : vector<8x384xf32> to vector<8x128xf32>
    %36 = arith.mulf %25, %35 : vector<8x128xf32>
    %37 = arith.addf %34, %36 : vector<8x128xf32>
    %38 = math.tanh %37 : vector<8x128xf32>
    %cst_14 = arith.constant 1.000000e+00 : f32
    %39 = vector.broadcast %cst_14 : f32 to vector<8x128xf32>
    %40 = arith.subf %39, %33 : vector<8x128xf32>
    %41 = arith.mulf %40, %38 : vector<8x128xf32>
    %42 = arith.mulf %33, %3 : vector<8x128xf32>
    %43 = arith.addf %41, %42 : vector<8x128xf32>
    %c0_15 = arith.constant 0 : index
    %c0_16 = arith.constant 0 : index
    %44 = vector.load %arg14[%c0_15, %c0_16] : memref<8x128xf32, #tpu.memory_space<vmem>>, vector<8x128xf32>
    tpu.vector_store %arg14[%c0_15, %c0_16], %43 {strides = array<i32>} : memref<8x128xf32, #tpu.memory_space<vmem>>, vector<8x128xf32>,
    %c0_17 = arith.constant 0 : index
    %c0_18 = arith.constant 0 : index
    %45 = vector.load %arg13[%c0_17, %c0_18] : memref<8x128xf32, #tpu.memory_space<vmem>>, vector<8x128xf32>
    tpu.vector_store %arg13[%c0_17, %c0_18], %43 {strides = array<i32>} : memref<8x128xf32, #tpu.memory_space<vmem>>, vector<8x128xf32>,
    %46 = arith.truncf %43 : vector<8x128xf32> to vector<8x128xbf16>
    %c0_19 = arith.constant 0 : index
    %c0_20 = arith.constant 0 : index
    %47 = vector.load %arg6[%c0_19, %c0_20] : memref<384x128xbf16, #tpu.memory_space<vmem>>, vector<128x128xbf16>
    %cst_21 = arith.constant dense<0.000000e+00> : vector<8x128xf32>
    %48 = tpu.matmul %46, %47, %cst_21 {dimension_numbers = #tpu.dot_dimension_numbers<[1], [0], [0], [1], [0, 0, 1, 1], [], []>} : vector<8x128xbf16>, vector<128x128xbf16>, vector<8x128xf32> -> vector<8x128xf32>
    %c0_22 = arith.constant 0 : index
    %c0_23 = arith.constant 0 : index
    %49 = vector.load %arg9[%c0_22, %c0_23] : memref<2x128xf32, #tpu.memory_space<vmem>>, vector<1x128xf32>
    %50 = vector.broadcast %49 : vector<1x128xf32> to vector<8x128xf32>
    %51 = arith.addf %48, %50 : vector<8x128xf32>
    %c0_24 = arith.constant 0 : index
    %c0_25 = arith.constant 0 : index
    %c0_26 = arith.constant 0 : index
    %52 = vector.load %arg3[%c0_24, %c0_25, %c0_26] : memref<8x8x128xf32, #tpu.memory_space<vmem>>, vector<8x8x128xf32>
    %53 = vector.shape_cast %51 : vector<8x128xf32> to vector<8x1x128xf32>
    %54 = vector.broadcast %53 : vector<8x1x128xf32> to vector<8x8x128xf32>
    %55 = arith.mulf %54, %52 : vector<8x8x128xf32>
    %cst_27 = arith.constant dense<0.000000e+00> : vector<8x8xf32>
    %56 = vector.multi_reduction <add>, %55, %cst_27 [2] : vector<8x8x128xf32> to vector<8x8xf32>
    %c0_28 = arith.constant 0 : index
    %c0_29 = arith.constant 0 : index
    %57 = vector.load %arg4[%c0_28, %c0_29] : memref<8x8xf32, #tpu.memory_space<vmem>>, vector<8x8xf32>
    %58 = arith.addf %56, %57 : vector<8x8xf32>
    %cst_30 = arith.constant dense<0xFF800000> : vector<8xf32>
    %59 = vector.multi_reduction <maximumf>, %58, %cst_30 [1] : vector<8x8xf32> to vector<8xf32>
    %60 = vector.shape_cast %59 : vector<8xf32> to vector<8x1xf32>
    %61 = vector.broadcast %60 : vector<8x1xf32> to vector<8x8xf32>
    %62 = arith.subf %58, %61 : vector<8x8xf32>
    %63 = math.exp %62 : vector<8x8xf32>
    %cst_31 = arith.constant dense<0.000000e+00> : vector<8xf32>
    %64 = vector.multi_reduction <add>, %63, %cst_31 [1] : vector<8x8xf32> to vector<8xf32>
    %65 = vector.shape_cast %64 : vector<8xf32> to vector<8x1xf32>
    %66 = tpu.reciprocal %65 {approx = true} : vector<8x1xf32> -> vector<8x1xf32>
    %67 = vector.broadcast %66 : vector<8x1xf32> to vector<8x8xf32>
    %68 = arith.mulf %63, %67 : vector<8x8xf32>
    %c0_32 = arith.constant 0 : index
    %c0_33 = arith.constant 0 : index
    %c0_34 = arith.constant 0 : index
    %69 = vector.load %arg12[%c0_32, %c0_33, %c0_34] : memref<1x8x8xf32, #tpu.memory_space<vmem>>, vector<1x8x8xf32>
    %70 = vector.shape_cast %69 : vector<1x8x8xf32> to vector<8x8xf32>
    %71 = vector.shape_cast %68 : vector<8x8xf32> to vector<1x8x8xf32>
    tpu.vector_store %arg12[%c0_32, %c0_33, %c0_34], %71 {strides = array<i32>} : memref<1x8x8xf32, #tpu.memory_space<vmem>>, vector<1x8x8xf32>,
    %72 = vector.shape_cast %68 : vector<8x8xf32> to vector<8x8x1xf32>
    %73 = vector.broadcast %72 : vector<8x8x1xf32> to vector<8x8x128xf32>
    %74 = arith.mulf %73, %52 : vector<8x8x128xf32>
    %cst_35 = arith.constant dense<0.000000e+00> : vector<8x128xf32>
    %75 = vector.multi_reduction <add>, %74, %cst_35 [1] : vector<8x8x128xf32> to vector<8x128xf32>
    %76 = tpu.concatenate %43, %75 in 1 : vector<8x128xf32>, vector<8x128xf32> -> vector<8x256xf32>
    %77 = arith.truncf %76 : vector<8x256xf32> to vector<8x256xbf16>
    %c128_36 = arith.constant 128 : index
    %c0_37 = arith.constant 0 : index
    %78 = vector.load %arg6[%c128_36, %c0_37] : memref<384x128xbf16, #tpu.memory_space<vmem>>, vector<256x128xbf16>
    %cst_38 = arith.constant dense<0.000000e+00> : vector<8x128xf32>
    %79 = tpu.matmul %77, %78, %cst_38 {dimension_numbers = #tpu.dot_dimension_numbers<[1], [0], [0], [1], [0, 0, 1, 1], [], []>} : vector<8x256xbf16>, vector<256x128xbf16>, vector<8x128xf32> -> vector<8x128xf32>
    %c1_39 = arith.constant 1 : index
    %c0_40 = arith.constant 0 : index
    %80 = vector.load %arg9[%c1_39, %c0_40] : memref<2x128xf32, #tpu.memory_space<vmem>>, vector<1x128xf32>
    %81 = vector.broadcast %80 : vector<1x128xf32> to vector<8x128xf32>
    %82 = arith.addf %79, %81 : vector<8x128xf32>
    %83 = math.tanh %82 : vector<8x128xf32>
    %84 = arith.truncf %83 : vector<8x128xf32> to vector<8x128xbf16>
    %c0_41 = arith.constant 0 : index
    %c0_42 = arith.constant 0 : index
    %85 = vector.load %arg7[%c0_41, %c0_42] : memref<128x128xbf16, #tpu.memory_space<vmem>>, vector<128x128xbf16>
    %cst_43 = arith.constant dense<0.000000e+00> : vector<8x128xf32>
    %86 = tpu.matmul %84, %85, %cst_43 {dimension_numbers = #tpu.dot_dimension_numbers<[1], [0], [0], [1], [0, 0, 1, 1], [], []>} : vector<8x128xbf16>, vector<128x128xbf16>, vector<8x128xf32> -> vector<8x128xf32>
    %c0_44 = arith.constant 0 : index
    %c0_45 = arith.constant 0 : index
    %87 = vector.load %arg10[%c0_44, %c0_45] : memref<1x128xf32, #tpu.memory_space<vmem>>, vector<1x128xf32>
    %88 = vector.broadcast %87 : vector<1x128xf32> to vector<8x128xf32>
    %89 = arith.addf %86, %88 : vector<8x128xf32>
    %cst_46 = arith.constant dense<0xFF800000> : vector<8xf32>
    %90 = vector.multi_reduction <maximumf>, %89, %cst_46 [1] : vector<8x128xf32> to vector<8xf32>
    %91 = vector.shape_cast %90 : vector<8xf32> to vector<8x1xf32>
    %92 = vector.broadcast %91 : vector<8x1xf32> to vector<8x128xf32>
    %93 = arith.subf %89, %92 : vector<8x128xf32>
    %94 = math.exp %93 : vector<8x128xf32>
    %cst_47 = arith.constant dense<0.000000e+00> : vector<8xf32>
    %95 = vector.multi_reduction <add>, %94, %cst_47 [1] : vector<8x128xf32> to vector<8xf32>
    %96 = vector.shape_cast %95 : vector<8xf32> to vector<8x1xf32>
    %97 = math.log %96 : vector<8x1xf32>
    %98 = arith.addf %97, %91 : vector<8x1xf32>
    %99 = vector.broadcast %98 : vector<8x1xf32> to vector<8x128xf32>
    %100 = arith.subf %89, %99 : vector<8x128xf32>
    %c0_48 = arith.constant 0 : index
    %c0_49 = arith.constant 0 : index
    %c0_50 = arith.constant 0 : index
    %101 = vector.load %arg11[%c0_48, %c0_49, %c0_50] : memref<1x8x128xf32, #tpu.memory_space<vmem>>, vector<1x8x128xf32>
    %102 = vector.shape_cast %101 : vector<1x8x128xf32> to vector<8x128xf32>
    %103 = vector.shape_cast %100 : vector<8x128xf32> to vector<1x8x128xf32>
    tpu.vector_store %arg11[%c0_48, %c0_49, %c0_50], %103 {strides = array<i32>} : memref<1x8x128xf32, #tpu.memory_space<vmem>>, vector<1x8x128xf32>,
    return
  }
  func.func @transform_0(%arg0: i32) -> (i32, i32, i32) {
    %c0_i32 = arith.constant 0 : i32
    %c0_i32_0 = arith.constant 0 : i32
    %c0_i32_1 = arith.constant 0 : i32
    return %arg0, %c0_i32, %c0_i32_0 : i32, i32, i32
  }
  func.func @transform_1(%arg0: i32) -> (i32, i32) {
    %c0_i32 = arith.constant 0 : i32
    %c0_i32_0 = arith.constant 0 : i32
    %c0_i32_1 = arith.constant 0 : i32
    return %c0_i32, %c0_i32_0 : i32, i32
  }
  func.func @transform_2(%arg0: i32) -> (i32, i32, i32) {
    %c0_i32 = arith.constant 0 : i32
    %c0_i32_0 = arith.constant 0 : i32
    %c0_i32_1 = arith.constant 0 : i32
    %c0_i32_2 = arith.constant 0 : i32
    return %c0_i32, %c0_i32_0, %c0_i32_1 : i32, i32, i32
  }
  func.func @transform_3(%arg0: i32) -> (i32, i32) {
    %c0_i32 = arith.constant 0 : i32
    %c0_i32_0 = arith.constant 0 : i32
    %c0_i32_1 = arith.constant 0 : i32
    return %c0_i32, %c0_i32_0 : i32, i32
  }
  func.func @transform_4(%arg0: i32) -> (i32, i32) {
    %c0_i32 = arith.constant 0 : i32
    %c0_i32_0 = arith.constant 0 : i32
    %c0_i32_1 = arith.constant 0 : i32
    return %c0_i32, %c0_i32_0 : i32, i32
  }
  func.func @transform_5(%arg0: i32) -> (i32, i32) {
    %c0_i32 = arith.constant 0 : i32
    %c0_i32_0 = arith.constant 0 : i32
    %c0_i32_1 = arith.constant 0 : i32
    return %c0_i32, %c0_i32_0 : i32, i32
  }
  func.func @transform_6(%arg0: i32) -> (i32, i32) {
    %c0_i32 = arith.constant 0 : i32
    %c0_i32_0 = arith.constant 0 : i32
    %c0_i32_1 = arith.constant 0 : i32
    return %c0_i32, %c0_i32_0 : i32, i32
  }
  func.func @transform_7(%arg0: i32) -> (i32, i32) {
    %c0_i32 = arith.constant 0 : i32
    %c0_i32_0 = arith.constant 0 : i32
    %c0_i32_1 = arith.constant 0 : i32
    return %c0_i32, %c0_i32_0 : i32, i32
  }
  func.func @transform_8(%arg0: i32) -> (i32, i32) {
    %c0_i32 = arith.constant 0 : i32
    %c0_i32_0 = arith.constant 0 : i32
    %c0_i32_1 = arith.constant 0 : i32
    return %c0_i32, %c0_i32_0 : i32, i32
  }
  func.func @transform_9(%arg0: i32) -> (i32, i32) {
    %c0_i32 = arith.constant 0 : i32
    %c0_i32_0 = arith.constant 0 : i32
    %c0_i32_1 = arith.constant 0 : i32
    return %c0_i32, %c0_i32_0 : i32, i32
  }
  func.func @transform_10(%arg0: i32) -> (i32, i32, i32) {
    %c0_i32 = arith.constant 0 : i32
    %c0_i32_0 = arith.constant 0 : i32
    %c0_i32_1 = arith.constant 0 : i32
    return %arg0, %c0_i32, %c0_i32_0 : i32, i32, i32
  }
  func.func @transform_11(%arg0: i32) -> (i32, i32, i32) {
    %c0_i32 = arith.constant 0 : i32
    %c0_i32_0 = arith.constant 0 : i32
    %c0_i32_1 = arith.constant 0 : i32
    return %arg0, %c0_i32, %c0_i32_0 : i32, i32, i32
  }
  func.func @transform_12(%arg0: i32) -> (i32, i32) {
    %c0_i32 = arith.constant 0 : i32
    %c0_i32_0 = arith.constant 0 : i32
    %c0_i32_1 = arith.constant 0 : i32
    return %c0_i32, %c0_i32_0 : i32, i32
  }
}

</mosaic_0001>

<llo_original>
// kernel: attn_decoder_decode.1
$region0: #{attn_decoder_decode.1}
  #allocation0 [shape = 'u32[]', space=smem, size = 0x4, offset = 0x4, fixed_abs, tag = 'smem constant byte address 0x4 - core index']
  #allocation1 [shape = 'u32[144,128]{1,0:T(1,128)}', space=vmem, size = 0x12000, scoped, tag = 'internal scratch']
  #allocation2 [shape = 'f32[8,128]{1,0:T(8,128)}', space=vmem, size = 0x1000, scoped, tag = 'scratch operand']
  %s0 = inlined_call_operand.vmem [shape: f32[1,8,128], index: 0, kind: input, shape index: {}]
  %s1 = inlined_call_operand.vmem [shape: f32[8,128], index: 1, kind: input, shape index: {}]
  %s2 = inlined_call_operand.vmem [shape: f32[8,8,128], index: 2, kind: input, shape index: {}]
  %s3 = inlined_call_operand.vmem [shape: f32[8,8], index: 3, kind: input, shape index: {}]
  %s4 = inlined_call_operand.hbm [shape: bf16[256,384], index: 4, kind: input, shape index: {}]
  %s5 = inlined_call_operand.vmem [shape: bf16[384,128], index: 5, kind: input, shape index: {}]
  %s6 = inlined_call_operand.vmem [shape: bf16[128,128], index: 6, kind: input, shape index: {}]
  %s7 = inlined_call_operand.hbm [shape: f32[2,384], index: 7, kind: input, shape index: {}]
  %s8 = inlined_call_operand.vmem [shape: f32[2,128], index: 8, kind: input, shape index: {}]
  %s9 = inlined_call_operand.hbm [shape: f32[1,128], index: 9, kind: input, shape index: {}]
  %s10 = inlined_call_operand.vmem [shape: f32[1,8,128], index: 10, kind: output, shape index: {0}]
  %s11 = inlined_call_operand.vmem [shape: f32[1,8,8], index: 11, kind: output, shape index: {1}]
  %s12 = inlined_call_operand.vmem [shape: f32[8,128], index: 12, kind: output, shape index: {2}]
  %13 = xla_tuple %s10, %s11, %s12
  %s14 = sld [smem:[#allocation0]]
  $region82: #{attn_decoder_decode.1} parent=0
    _
  %s16 = ssub.s32 1, %s14
  %s17 = scalar_select 0, %s16, %s14
  $region1: #{attn_decoder_decode.1} parent=0
    #allocation3 [shape = 'u8[196608]{0}', space=vmem, size = 0x30000, scoped, tag = 'input window, operand 4, single buffered']
    #allocation4 [shape = 's32[1]{0}', space=sflag, size = 0x4, scoped, tag = 'scoped memory for attn_decoder_decode.1']
    #allocation5 [shape = 'u8[3072]{0}', space=vmem, size = 0xc00, scoped, tag = 'input window, operand 7, single buffered']
    #allocation6 [shape = 's32[1]{0}', space=sflag, size = 0x4, scoped, tag = 'scoped memory for attn_decoder_decode.1']
    #allocation7 [shape = 'u8[512]{0}', space=vmem, size = 0x400, scoped, tag = 'input window, operand 9, single buffered']
    %18 = vsyncpa [#allocation4], 0
    %19 = vsyncpa [#allocation6], 0
    // Predicated region
    $region2: #{attn_decoder_decode.1} parent=1 // pred_check
      _
    $region3: #{attn_decoder_decode.1} parent=1 // pred_check_branch
      %21 = sbr.rel (0) target = $region5
    $region4: #{attn_decoder_decode.1} parent=1 // pred_region
      _
    $region5: #{attn_decoder_decode.1} parent=1 // pred_fallthru
      _
    // Predicated region
    $region6: #{attn_decoder_decode.1} parent=1 // pred_check
      _
    $region7: #{attn_decoder_decode.1} parent=1 // pred_check_branch
      %23 = sbr.rel (0) target = $region9
    $region8: #{attn_decoder_decode.1} parent=1 // pred_region
      _
    $region9: #{attn_decoder_decode.1} parent=1 // pred_fallthru
      _
    // Predicated region
    $region10: #{attn_decoder_decode.1} parent=1 // pred_check
      _
    $region11: #{attn_decoder_decode.1} parent=1 // pred_check_branch
      %25 = sbr.rel (0) target = $region13
    $region12: #{attn_decoder_decode.1} parent=1 // pred_region
      _
    $region13: #{attn_decoder_decode.1} parent=1 // pred_fallthru
      _
    // Predicated region
    $region14: #{attn_decoder_decode.1} parent=1 // pred_check
      _
    $region15: #{attn_decoder_decode.1} parent=1 // pred_check_branch
      %27 = sbr.rel (0) target = $region17
    $region16: #{attn_decoder_decode.1} parent=1 // pred_region
      _
    $region17: #{attn_decoder_decode.1} parent=1 // pred_fallthru
      _
    // Predicated region
    $region18: #{attn_decoder_decode.1} parent=1 // pred_check
      _
    $region19: #{attn_decoder_decode.1} parent=1 // pred_check_branch
      %29 = sbr.rel (0) target = $region21
    $region20: #{attn_decoder_decode.1} parent=1 // pred_region
      %s31 = ssub.s32 6144, 6144
      %32 = vsyncadd [#allocation4], %s31
      %s33 = sshll.u32 [#allocation3], 4
      %s34 = int_to_ptr.vmem [resolvable:$true] %s33
      %39 = dma.hbm_to_vmem [thread:$0]  %s4, 6144, %s34, [#allocation4], 192, 192, 12
    $region21: #{attn_decoder_decode.1} parent=1 // pred_fallthru
      _
    // Predicated region
    $region22: #{attn_decoder_decode.1} parent=1 // pred_check
      _
    $region23: #{attn_decoder_decode.1} parent=1 // pred_check_branch
      %41 = sbr.rel (0) target = $region25
    $region24: #{attn_decoder_decode.1} parent=1 // pred_region
      _
    $region25: #{attn_decoder_decode.1} parent=1 // pred_fallthru
      _
    // Predicated region
    $region26: #{attn_decoder_decode.1} parent=1 // pred_check
      _
    $region27: #{attn_decoder_decode.1} parent=1 // pred_check_branch
      %43 = sbr.rel (0) target = $region29
    $region28: #{attn_decoder_decode.1} parent=1 // pred_region
      _
    $region29: #{attn_decoder_decode.1} parent=1 // pred_fallthru
      _
    // Predicated region
    $region30: #{attn_decoder_decode.1} parent=1 // pred_check
      _
    $region31: #{attn_decoder_decode.1} parent=1 // pred_check_branch
      %45 = sbr.rel (0) target = $region33
    $region32: #{attn_decoder_decode.1} parent=1 // pred_region
      %s47 = ssub.s32 96, 96
      %48 = vsyncadd [#allocation6], %s47
      %s50 = sshll.u32 [#allocation5], 4
      %s51 = int_to_ptr.vmem [resolvable:$true] %s50
      %53 = dma.hbm_to_vmem [thread:$0]  %s7, 96, %s51, [#allocation6]
    $region33: #{attn_decoder_decode.1} parent=1 // pred_fallthru
      _
    // Predicated region
    $region34: #{attn_decoder_decode.1} parent=1 // pred_check
      _
    $region35: #{attn_decoder_decode.1} parent=1 // pred_check_branch
      %55 = sbr.rel (0) target = $region37
    $region36: #{attn_decoder_decode.1} parent=1 // pred_region
      _
    $region37: #{attn_decoder_decode.1} parent=1 // pred_fallthru
      _
    // Predicated region
    $region38: #{attn_decoder_decode.1} parent=1 // pred_check
      _
    $region39: #{attn_decoder_decode.1} parent=1 // pred_check_branch
      %57 = sbr.rel (0) target = $region41
    $region40: #{attn_decoder_decode.1} parent=1 // pred_region
      %s59 = ssub.s32 16, 16
      %60 = vsyncadd [#allocation6], %s59
      %s62 = sshll.u32 [#allocation7], 4
      %s63 = int_to_ptr.vmem [resolvable:$true] %s62
      %65 = dma.hbm_to_vmem [thread:$0]  %s9, 16, %s63, [#allocation6]
    $region41: #{attn_decoder_decode.1} parent=1 // pred_fallthru
      _
    // Predicated region
    $region42: #{attn_decoder_decode.1} parent=1 // pred_check
      _
    $region43: #{attn_decoder_decode.1} parent=1 // pred_check_branch
      %67 = sbr.rel (0) target = $region45
    $region44: #{attn_decoder_decode.1} parent=1 // pred_region
      %68 = dma.done [#allocation4], 6144
    $region45: #{attn_decoder_decode.1} parent=1 // pred_fallthru
      _
    // Predicated region
    $region46: #{attn_decoder_decode.1} parent=1 // pred_check
      _
    $region47: #{attn_decoder_decode.1} parent=1 // pred_check_branch
      %70 = sbr.rel (0) target = $region49
    $region48: #{attn_decoder_decode.1} parent=1 // pred_region
      %71 = dma.done [#allocation6], 96
    $region49: #{attn_decoder_decode.1} parent=1 // pred_fallthru
      _
    // Predicated region
    $region50: #{attn_decoder_decode.1} parent=1 // pred_check
      _
    $region51: #{attn_decoder_decode.1} parent=1 // pred_check_branch
      %73 = sbr.rel (0) target = $region53
    $region52: #{attn_decoder_decode.1} parent=1 // pred_region
      %74 = dma.done [#allocation6], 16
    $region53: #{attn_decoder_decode.1} parent=1 // pred_fallthru
      _
    %p76 = scmp.eq.s32.totalorder 0, 0
    // Predicated region
    $region54: #{attn_decoder_decode.1} parent=1 // pred_check
      %p77 = pneg %p76
    $region55: #{attn_decoder_decode.1} parent=1 // pred_check_branch
      %79 = sbr.rel (%p77) target = $region57
    $region56: #{attn_decoder_decode.1} parent=1 // pred_region
      %v80 = vld [vmem:[%s1] sm:$0xff]
      %81 = vst [vmem:[#allocation2] sm:$0xff] %v80
    $region57: #{attn_decoder_decode.1} parent=1 // pred_fallthru
      _
    %v82 = vld [vmem:[#allocation2] sm:$0xff]
    %v83 = vld [vmem:[%s0] sm:$0xff]
    %v84 = vpack.c.bf16 %v83, %v83
    %v85 = vpack.c.bf16 %v82, %v82
    %v86 = vld [vmem:[#allocation3] sm:$0xff]
    %v87 = vld [vmem:[#allocation3 + $0x8] sm:$0xf]
    %v88 = vld [vmem:[#allocation3 + $0xc] sm:$0xff]
    %v89 = vld [vmem:[#allocation3 + $0x14] sm:$0xf]
    %v90 = vld [vmem:[#allocation3 + $0x18] sm:$0xff]
    %v91 = vld [vmem:[#allocation3 + $0x20] sm:$0xf]
    %v92 = vld [vmem:[#allocation3 + $0x24] sm:$0xff]
    %v93 = vld [vmem:[#allocation3 + $0x2c] sm:$0xf]
    %v94 = vld [vmem:[#allocation3 + $0x30] sm:$0xff]
    %v95 = vld [vmem:[#allocation3 + $0x38] sm:$0xf]
    %v96 = vld [vmem:[#allocation3 + $0x3c] sm:$0xff]
    %v97 = vld [vmem:[#allocation3 + $0x44] sm:$0xf]
    %v98 = vld [vmem:[#allocation3 + $0x48] sm:$0xff]
    %v99 = vld [vmem:[#allocation3 + $0x50] sm:$0xf]
    %v100 = vld [vmem:[#allocation3 + $0x54] sm:$0xff]
    %v101 = vld [vmem:[#allocation3 + $0x5c] sm:$0xf]
    %v102 = vld [vmem:[#allocation3 + $0x60] sm:$0xff]
    %v103 = vld [vmem:[#allocation3 + $0x68] sm:$0xf]
    %v104 = vld [vmem:[#allocation3 + $0x6c] sm:$0xff]
    %v105 = vld [vmem:[#allocation3 + $0x74] sm:$0xf]
    %v106 = vld [vmem:[#allocation3 + $0x78] sm:$0xff]
    %v107 = vld [vmem:[#allocation3 + $0x80] sm:$0xf]
    %v108 = vld [vmem:[#allocation3 + $0x84] sm:$0xff]
    %v109 = vld [vmem:[#allocation3 + $0x8c] sm:$0xf]
    %v110 = vld [vmem:[#allocation3 + $0x90] sm:$0xff]
    %v111 = vld [vmem:[#allocation3 + $0x98] sm:$0xf]
    %v112 = vld [vmem:[#allocation3 + $0x9c] sm:$0xff]
    %v113 = vld [vmem:[#allocation3 + $0xa4] sm:$0xf]
    %v114 = vld [vmem:[#allocation3 + $0xa8] sm:$0xff]
    %v115 = vld [vmem:[#allocation3 + $0xb0] sm:$0xf]
    %v116 = vld [vmem:[#allocation3 + $0xb4] sm:$0xff]
    %v117 = vld [vmem:[#allocation3 + $0xbc] sm:$0xf]
    %v118 = vld [vmem:[#allocation5] ss:$2 sm:$0x7]
    %v120 = vlaneseq
    %v121 = vshrl.u32 %v120, 7
    %v122 = vsub.s32 0, %v121
    %v123 = vrot.slane %v118, %v122
    %v124 = vlaneseq
    %v125 = vshrl.u32 %v124, 7
    %v126 = vsub.s32 1, %v125
    %v127 = vrot.slane %v118, %v126
    %v128 = vlaneseq
    %v129 = vshrl.u32 %v128, 7
    %v130 = vsub.s32 2, %v129
    %v131 = vrot.slane %v118, %v130
    %v167 = vunpack.c.l.b16 %v86
    %v168 = vunpack.c.h.b16 %v86
    %v169 = vunpack.c.l.b16 %v87
    %v170 = vunpack.c.l.b16 %v88
    %v171 = vunpack.c.h.b16 %v88
    %v172 = vunpack.c.l.b16 %v89
    %v173 = vunpack.c.l.b16 %v90
    %v174 = vunpack.c.h.b16 %v90
    %v175 = vunpack.c.l.b16 %v91
    %v176 = vunpack.c.l.b16 %v92
    %v177 = vunpack.c.h.b16 %v92
    %v178 = vunpack.c.l.b16 %v93
    %v179 = vunpack.c.l.b16 %v94
    %v180 = vunpack.c.h.b16 %v94
    %v181 = vunpack.c.l.b16 %v95
    %v182 = vunpack.c.l.b16 %v96
    %v183 = vunpack.c.h.b16 %v96
    %v184 = vunpack.c.l.b16 %v97
    %v185 = vunpack.c.l.b16 %v98
    %v186 = vunpack.c.h.b16 %v98
    %v187 = vunpack.c.l.b16 %v99
    %v188 = vunpack.c.l.b16 %v100
    %v189 = vunpack.c.h.b16 %v100
    %v190 = vunpack.c.l.b16 %v101
    %v191 = vunpack.c.l.b16 %v102
    %v192 = vunpack.c.h.b16 %v102
    %v193 = vunpack.c.l.b16 %v103
    %v194 = vunpack.c.l.b16 %v104
    %v195 = vunpack.c.h.b16 %v104
    %v196 = vunpack.c.l.b16 %v105
    %v197 = vunpack.c.l.b16 %v106
    %v198 = vunpack.c.h.b16 %v106
    %v199 = vunpack.c.l.b16 %v107
    %v200 = vunpack.c.l.b16 %v108
    %v201 = vunpack.c.h.b16 %v108
    %v202 = vunpack.c.l.b16 %v109
    %v203 = vunpack.c.l.b16 %v110
    %v204 = vunpack.c.h.b16 %v110
    %v205 = vunpack.c.l.b16 %v111
    %v206 = vunpack.c.l.b16 %v112
    %v207 = vunpack.c.h.b16 %v112
    %v208 = vunpack.c.l.b16 %v113
    %v209 = vunpack.c.l.b16 %v114
    %v210 = vunpack.c.h.b16 %v114
    %v211 = vunpack.c.l.b16 %v115
    %v212 = vunpack.c.l.b16 %v116
    %v213 = vunpack.c.h.b16 %v116
    %v214 = vunpack.c.l.b16 %v117
    %v215 = vpack.c.b16 %v170, %v167
    %v216 = vpack.c.b16 %v171, %v168
    %v217 = vpack.c.b16 %v172, %v169
    %v218 = vpack.c.b16 %v176, %v173
    %v219 = vpack.c.b16 %v177, %v174
    %v220 = vpack.c.b16 %v178, %v175
    %v221 = vpack.c.b16 %v182, %v179
    %v222 = vpack.c.b16 %v183, %v180
    %v223 = vpack.c.b16 %v184, %v181
    %v224 = vpack.c.b16 %v188, %v185
    %v225 = vpack.c.b16 %v189, %v186
    %v226 = vpack.c.b16 %v190, %v187
    %v227 = vpack.c.b16 %v194, %v191
    %v228 = vpack.c.b16 %v195, %v192
    %v229 = vpack.c.b16 %v196, %v193
    %v230 = vpack.c.b16 %v200, %v197
    %v231 = vpack.c.b16 %v201, %v198
    %v232 = vpack.c.b16 %v202, %v199
    %v233 = vpack.c.b16 %v206, %v203
    %v234 = vpack.c.b16 %v207, %v204
    %v235 = vpack.c.b16 %v208, %v205
    %v236 = vpack.c.b16 %v212, %v209
    %v237 = vpack.c.b16 %v213, %v210
    %v238 = vpack.c.b16 %v214, %v211
    %263 = vmatprep.subr.bf16.mxu0 %v216
    %264 = vmatpush1.bf16.msra.mxu0 %v215
    %265 = vmatprep.subr.bf16.mxu0 %v219
    %266 = vmatpush1.bf16.msra.mxu0 %v218
    %267 = vmatprep.subr.bf16.mxu0 %v222
    %268 = vmatpush1.bf16.msra.mxu0 %v221
    %269 = vmatprep.subr.bf16.mxu0 %v225
    %270 = vmatpush1.bf16.msra.mxu0 %v224
    %271 = vmatprep.subr.bf16.mxu0 %v228
    %272 = vmatpush1.bf16.msra.mxu0 %v227
    %273 = vmatprep.subr.bf16.mxu0 %v231
    %274 = vmatpush1.bf16.msra.mxu0 %v230
    %275 = vmatprep.subr.bf16.mxu0 %v234
    %276 = vmatpush1.bf16.msra.mxu0 %v233
    %277 = vmatprep.subr.bf16.mxu0 %v237
    %278 = vmatpush1.bf16.msra.mxu0 %v236
    %279 = vmatprep.subr.bf16.mxu0 0
    %280 = vmatpush1.bf16.msra.mxu0 0
    %281 = vmatprep.subr.bf16.mxu0 0
    %282 = vmatpush1.bf16.msra.mxu0 0
    %283 = vmatprep.subr.bf16.mxu0 0
    %284 = vmatpush1.bf16.msra.mxu0 0
    %285 = vmatprep.subr.bf16.mxu0 0
    %286 = vmatpush1.bf16.msra.mxu0 0
    %287 = vmatprep.subr.bf16.mxu0 0
    %288 = vmatpush1.bf16.msra.mxu0 0
    %289 = vmatprep.subr.bf16.mxu0 0
    %290 = vmatpush1.bf16.msra.mxu0 0
    %291 = vmatprep.subr.bf16.mxu0 0
    %292 = vmatpush1.bf16.msra.mxu0 0
    %293 = vmatprep.subr.bf16.mxu0 0
    %294 = vmatpush1.bf16.msra.mxu0 0
    %295 = vmatprep.mubr.bf16.mxu0 0
    %296 = vmatmul.mubr.bf16.gmra.mrb[0].mxu0 %v84
    %v297 = vpop.f32.mrb[0].mxu0
    %v298 = vadd.f32 %v123, %v297
    %v299 = vpop.f32.mrb[0].mxu0
    %v300 = vadd.f32 %v127, %v299
    %v301 = vpop.f32.mrb[0].mxu0
    %v302 = vpop.f32.mrb[0].mxu0
    %303 = vdwg.mxu0
    %304 = vmatprep.subr.bf16.mxu0 0
    %305 = vmatpush1.bf16.msra.mxu0 %v217
    %306 = vmatprep.subr.bf16.mxu0 0
    %307 = vmatpush1.bf16.msra.mxu0 %v220
    %308 = vmatprep.subr.bf16.mxu0 0
    %309 = vmatpush1.bf16.msra.mxu0 %v223
    %310 = vmatprep.subr.bf16.mxu0 0
    %311 = vmatpush1.bf16.msra.mxu0 %v226
    %312 = vmatprep.subr.bf16.mxu0 0
    %313 = vmatpush1.bf16.msra.mxu0 %v229
    %314 = vmatprep.subr.bf16.mxu0 0
    %315 = vmatpush1.bf16.msra.mxu0 %v232
    %316 = vmatprep.subr.bf16.mxu0 0
    %317 = vmatpush1.bf16.msra.mxu0 %v235
    %318 = vmatprep.subr.bf16.mxu0 0
    %319 = vmatpush1.bf16.msra.mxu0 %v238
    %320 = vmatprep.subr.bf16.mxu0 0
    %321 = vmatpush1.bf16.msra.mxu0 0
    %322 = vmatprep.subr.bf16.mxu0 0
    %323 = vmatpush1.bf16.msra.mxu0 0
    %324 = vmatprep.subr.bf16.mxu0 0
    %325 = vmatpush1.bf16.msra.mxu0 0
    %326 = vmatprep.subr.bf16.mxu0 0
    %327 = vmatpush1.bf16.msra.mxu0 0
    %328 = vmatprep.subr.bf16.mxu0 0
    %329 = vmatpush1.bf16.msra.mxu0 0
    %330 = vmatprep.subr.bf16.mxu0 0
    %331 = vmatpush1.bf16.msra.mxu0 0
    %332 = vmatprep.subr.bf16.mxu0 0
    %333 = vmatpush1.bf16.msra.mxu0 0
    %334 = vmatprep.subr.bf16.mxu0 0
    %335 = vmatpush1.bf16.msra.mxu0 0
    %336 = vmatprep.mubr.bf16.mxu0 0
    %337 = vmatmul.mubr.bf16.gmra.mrb[0].mxu0 %v84
    %v338 = vpop.f32.mrb[0].mxu0
    %v339 = vadd.f32 %v131, %v338
    %v340 = vpop.f32.mrb[0].mxu0
    %v341 = vpop.f32.mrb[0].mxu0
    %v342 = vpop.f32.mrb[0].mxu0
    %343 = vdwg.mxu0
    %v344 = vld [vmem:[#allocation3 + $0xc0] sm:$0xff]
    %v345 = vld [vmem:[#allocation3 + $0xc8] sm:$0xf]
    %v346 = vld [vmem:[#allocation3 + $0xcc] sm:$0xff]
    %v347 = vld [vmem:[#allocation3 + $0xd4] sm:$0xf]
    %v348 = vld [vmem:[#allocation3 + $0xd8] sm:$0xff]
    %v349 = vld [vmem:[#allocation3 + $0xe0] sm:$0xf]
    %v350 = vld [vmem:[#allocation3 + $0xe4] sm:$0xff]
    %v351 = vld [vmem:[#allocation3 + $0xec] sm:$0xf]
    %v352 = vld [vmem:[#allocation3 + $0xf0] sm:$0xff]
    %v353 = vld [vmem:[#allocation3 + $0xf8] sm:$0xf]
    %v354 = vld [vmem:[#allocation3 + $0xfc] sm:$0xff]
    %v355 = vld [vmem:[#allocation3 + $0x104] sm:$0xf]
    %v356 = vld [vmem:[#allocation3 + $0x108] sm:$0xff]
    %v357 = vld [vmem:[#allocation3 + $0x110] sm:$0xf]
    %v358 = vld [vmem:[#allocation3 + $0x114] sm:$0xff]
    %v359 = vld [vmem:[#allocation3 + $0x11c] sm:$0xf]
    %v360 = vld [vmem:[#allocation3 + $0x120] sm:$0xff]
    %v361 = vld [vmem:[#allocation3 + $0x128] sm:$0xf]
    %v362 = vld [vmem:[#allocation3 + $0x12c] sm:$0xff]
    %v363 = vld [vmem:[#allocation3 + $0x134] sm:$0xf]
    %v364 = vld [vmem:[#allocation3 + $0x138] sm:$0xff]
    %v365 = vld [vmem:[#allocation3 + $0x140] sm:$0xf]
    %v366 = vld [vmem:[#allocation3 + $0x144] sm:$0xff]
    %v367 = vld [vmem:[#allocation3 + $0x14c] sm:$0xf]
    %v368 = vld [vmem:[#allocation3 + $0x150] sm:$0xff]
    %v369 = vld [vmem:[#allocation3 + $0x158] sm:$0xf]
    %v370 = vld [vmem:[#allocation3 + $0x15c] sm:$0xff]
    %v371 = vld [vmem:[#allocation3 + $0x164] sm:$0xf]
    %v372 = vld [vmem:[#allocation3 + $0x168] sm:$0xff]
    %v373 = vld [vmem:[#allocation3 + $0x170] sm:$0xf]
    %v374 = vld [vmem:[#allocation3 + $0x174] sm:$0xff]
    %v375 = vld [vmem:[#allocation3 + $0x17c] sm:$0xf]
    %s376 = scalar_lea.vmem [#allocation5], 1
    %v377 = vld [vmem:[%s376] ss:$2 sm:$0x7]
    %v379 = vlaneseq
    %v380 = vshrl.u32 %v379, 7
    %v381 = vsub.s32 0, %v380
    %v382 = vrot.slane %v377, %v381
    %v383 = vlaneseq
    %v384 = vshrl.u32 %v383, 7
    %v385 = vsub.s32 1, %v384
    %v386 = vrot.slane %v377, %v385
    %v387 = vlaneseq
    %v388 = vshrl.u32 %v387, 7
    %v389 = vsub.s32 2, %v388
    %v390 = vrot.slane %v377, %v389
    %v426 = vunpack.c.l.b16 %v344
    %v427 = vunpack.c.h.b16 %v344
    %v428 = vunpack.c.l.b16 %v345
    %v429 = vunpack.c.l.b16 %v346
    %v430 = vunpack.c.h.b16 %v346
    %v431 = vunpack.c.l.b16 %v347
    %v432 = vunpack.c.l.b16 %v348
    %v433 = vunpack.c.h.b16 %v348
    %v434 = vunpack.c.l.b16 %v349
    %v435 = vunpack.c.l.b16 %v350
    %v436 = vunpack.c.h.b16 %v350
    %v437 = vunpack.c.l.b16 %v351
    %v438 = vunpack.c.l.b16 %v352
    %v439 = vunpack.c.h.b16 %v352
    %v440 = vunpack.c.l.b16 %v353
    %v441 = vunpack.c.l.b16 %v354
    %v442 = vunpack.c.h.b16 %v354
    %v443 = vunpack.c.l.b16 %v355
    %v444 = vunpack.c.l.b16 %v356
    %v445 = vunpack.c.h.b16 %v356
    %v446 = vunpack.c.l.b16 %v357
    %v447 = vunpack.c.l.b16 %v358
    %v448 = vunpack.c.h.b16 %v358
    %v449 = vunpack.c.l.b16 %v359
    %v450 = vunpack.c.l.b16 %v360
    %v451 = vunpack.c.h.b16 %v360
    %v452 = vunpack.c.l.b16 %v361
    %v453 = vunpack.c.l.b16 %v362
    %v454 = vunpack.c.h.b16 %v362
    %v455 = vunpack.c.l.b16 %v363
    %v456 = vunpack.c.l.b16 %v364
    %v457 = vunpack.c.h.b16 %v364
    %v458 = vunpack.c.l.b16 %v365
    %v459 = vunpack.c.l.b16 %v366
    %v460 = vunpack.c.h.b16 %v366
    %v461 = vunpack.c.l.b16 %v367
    %v462 = vunpack.c.l.b16 %v368
    %v463 = vunpack.c.h.b16 %v368
    %v464 = vunpack.c.l.b16 %v369
    %v465 = vunpack.c.l.b16 %v370
    %v466 = vunpack.c.h.b16 %v370
    %v467 = vunpack.c.l.b16 %v371
    %v468 = vunpack.c.l.b16 %v372
    %v469 = vunpack.c.h.b16 %v372
    %v470 = vunpack.c.l.b16 %v373
    %v471 = vunpack.c.l.b16 %v374
    %v472 = vunpack.c.h.b16 %v374
    %v473 = vunpack.c.l.b16 %v375
    %v474 = vpack.c.b16 %v429, %v426
    %v475 = vpack.c.b16 %v430, %v427
    %v476 = vpack.c.b16 %v431, %v428
    %v477 = vpack.c.b16 %v435, %v432
    %v478 = vpack.c.b16 %v436, %v433
    %v479 = vpack.c.b16 %v437, %v434
    %v480 = vpack.c.b16 %v441, %v438
    %v481 = vpack.c.b16 %v442, %v439
    %v482 = vpack.c.b16 %v443, %v440
    %v483 = vpack.c.b16 %v447, %v444
    %v484 = vpack.c.b16 %v448, %v445
    %v485 = vpack.c.b16 %v449, %v446
    %v486 = vpack.c.b16 %v453, %v450
    %v487 = vpack.c.b16 %v454, %v451
    %v488 = vpack.c.b16 %v455, %v452
    %v489 = vpack.c.b16 %v459, %v456
    %v490 = vpack.c.b16 %v460, %v457
    %v491 = vpack.c.b16 %v461, %v458
    %v492 = vpack.c.b16 %v465, %v462
    %v493 = vpack.c.b16 %v466, %v463
    %v494 = vpack.c.b16 %v467, %v464
    %v495 = vpack.c.b16 %v471, %v468
    %v496 = vpack.c.b16 %v472, %v469
    %v497 = vpack.c.b16 %v473, %v470
    %522 = vmatprep.subr.bf16.mxu0 %v475
    %523 = vmatpush1.bf16.msra.mxu0 %v474
    %524 = vmatprep.subr.bf16.mxu0 %v478
    %525 = vmatpush1.bf16.msra.mxu0 %v477
    %526 = vmatprep.subr.bf16.mxu0 %v481
    %527 = vmatpush1.bf16.msra.mxu0 %v480
    %528 = vmatprep.subr.bf16.mxu0 %v484
    %529 = vmatpush1.bf16.msra.mxu0 %v483
    %530 = vmatprep.subr.bf16.mxu0 %v487
    %531 = vmatpush1.bf16.msra.mxu0 %v486
    %532 = vmatprep.subr.bf16.mxu0 %v490
    %533 = vmatpush1.bf16.msra.mxu0 %v489
    %534 = vmatprep.subr.bf16.mxu0 %v493
    %535 = vmatpush1.bf16.msra.mxu0 %v492
    %536 = vmatprep.subr.bf16.mxu0 %v496
    %537 = vmatpush1.bf16.msra.mxu0 %v495
    %538 = vmatprep.subr.bf16.mxu0 0
    %539 = vmatpush1.bf16.msra.mxu0 0
    %540 = vmatprep.subr.bf16.mxu0 0
    %541 = vmatpush1.bf16.msra.mxu0 0
    %542 = vmatprep.subr.bf16.mxu0 0
    %543 = vmatpush1.bf16.msra.mxu0 0
    %544 = vmatprep.subr.bf16.mxu0 0
    %545 = vmatpush1.bf16.msra.mxu0 0
    %546 = vmatprep.subr.bf16.mxu0 0
    %547 = vmatpush1.bf16.msra.mxu0 0
    %548 = vmatprep.subr.bf16.mxu0 0
    %549 = vmatpush1.bf16.msra.mxu0 0
    %550 = vmatprep.subr.bf16.mxu0 0
    %551 = vmatpush1.bf16.msra.mxu0 0
    %552 = vmatprep.subr.bf16.mxu0 0
    %553 = vmatpush1.bf16.msra.mxu0 0
    %554 = vmatprep.mubr.bf16.mxu0 0
    %555 = vmatmul.mubr.bf16.gmra.mrb[0].mxu0 %v85
    %v556 = vpop.f32.mrb[0].mxu0
    %v557 = vadd.f32 %v382, %v556
    %v558 = vpop.f32.mrb[0].mxu0
    %v559 = vadd.f32 %v386, %v558
    %v560 = vpop.f32.mrb[0].mxu0
    %v561 = vpop.f32.mrb[0].mxu0
    %562 = vdwg.mxu0
    %563 = vmatprep.subr.bf16.mxu0 0
    %564 = vmatpush1.bf16.msra.mxu0 %v476
    %565 = vmatprep.subr.bf16.mxu0 0
    %566 = vmatpush1.bf16.msra.mxu0 %v479
    %567 = vmatprep.subr.bf16.mxu0 0
    %568 = vmatpush1.bf16.msra.mxu0 %v482
    %569 = vmatprep.subr.bf16.mxu0 0
    %570 = vmatpush1.bf16.msra.mxu0 %v485
    %571 = vmatprep.subr.bf16.mxu0 0
    %572 = vmatpush1.bf16.msra.mxu0 %v488
    %573 = vmatprep.subr.bf16.mxu0 0
    %574 = vmatpush1.bf16.msra.mxu0 %v491
    %575 = vmatprep.subr.bf16.mxu0 0
    %576 = vmatpush1.bf16.msra.mxu0 %v494
    %577 = vmatprep.subr.bf16.mxu0 0
    %578 = vmatpush1.bf16.msra.mxu0 %v497
    %579 = vmatprep.subr.bf16.mxu0 0
    %580 = vmatpush1.bf16.msra.mxu0 0
    %581 = vmatprep.subr.bf16.mxu0 0
    %582 = vmatpush1.bf16.msra.mxu0 0
    %583 = vmatprep.subr.bf16.mxu0 0
    %584 = vmatpush1.bf16.msra.mxu0 0
    %585 = vmatprep.subr.bf16.mxu0 0
    %586 = vmatpush1.bf16.msra.mxu0 0
    %587 = vmatprep.subr.bf16.mxu0 0
    %588 = vmatpush1.bf16.msra.mxu0 0
    %589 = vmatprep.subr.bf16.mxu0 0
    %590 = vmatpush1.bf16.msra.mxu0 0
    %591 = vmatprep.subr.bf16.mxu0 0
    %592 = vmatpush1.bf16.msra.mxu0 0
    %593 = vmatprep.subr.bf16.mxu0 0
    %594 = vmatpush1.bf16.msra.mxu0 0
    %595 = vmatprep.mubr.bf16.mxu0 0
    %596 = vmatmul.mubr.bf16.gmra.mrb[0].mxu0 %v85
    %v597 = vpop.f32.mrb[0].mxu0
    %v598 = vadd.f32 %v390, %v597
    %v599 = vpop.f32.mrb[0].mxu0
    %v600 = vpop.f32.mrb[0].mxu0
    %v601 = vpop.f32.mrb[0].mxu0
    %602 = vdwg.mxu0
    %v603 = vadd.f32 %v298, %v557
    %v604 = vxor.u32 %v603, 2147483648
    %v605 = vmul.f32 %v604, 1.442695
    %v606 = vpow.pop %v605
    %v607 = vadd.f32 %v606, 1.0
    %v608 = vrcp.pop %v607
    %v609 = vmul.f32 1.0, %v608
    %v610 = vadd.f32 %v300, %v559
    %v611 = vxor.u32 %v610, 2147483648
    %v612 = vmul.f32 %v611, 1.442695
    %v613 = vpow.pop %v612
    %v614 = vadd.f32 %v613, 1.0
    %v615 = vrcp.pop %v614
    %v616 = vmul.f32 1.0, %v615
    %v617 = vmul.f32 %v609, %v598
    %v618 = vadd.f32 %v339, %v617
    %v619 = vtanh.pop %v618
    %v620 = vsub.f32 1.0, %v616
    %v621 = vmul.f32 %v620, %v619
    %v622 = vmul.f32 %v616, %v82
    %v623 = vadd.f32 %v621, %v622
    %624 = vst [vmem:[#allocation2] sm:$0xff] %v623
    %625 = vst [vmem:[%s12] sm:$0xff] %v623
    %v626 = vpack.c.bf16 %v623, %v623
    %v627 = vld [vmem:[%s5] sm:$0xf]
    %v628 = vld [vmem:[%s5 + $0x4] sm:$0xf]
    %v629 = vld [vmem:[%s5 + $0x8] sm:$0xf]
    %v630 = vld [vmem:[%s5 + $0xc] sm:$0xf]
    %v631 = vld [vmem:[%s5 + $0x10] sm:$0xf]
    %v632 = vld [vmem:[%s5 + $0x14] sm:$0xf]
    %v633 = vld [vmem:[%s5 + $0x18] sm:$0xf]
    %v634 = vld [vmem:[%s5 + $0x1c] sm:$0xf]
    %v635 = vld [vmem:[%s5 + $0x20] sm:$0xf]
    %v636 = vld [vmem:[%s5 + $0x24] sm:$0xf]
    %v637 = vld [vmem:[%s5 + $0x28] sm:$0xf]
    %v638 = vld [vmem:[%s5 + $0x2c] sm:$0xf]
    %v639 = vld [vmem:[%s5 + $0x30] sm:$0xf]
    %v640 = vld [vmem:[%s5 + $0x34] sm:$0xf]
    %v641 = vld [vmem:[%s5 + $0x38] sm:$0xf]
    %v642 = vld [vmem:[%s5 + $0x3c] sm:$0xf]
    %v643 = vld [vmem:[%s8] sm:$0x1]
    %v644 = vlaneseq
    %v645 = vshrl.u32 %v644, 7
    %v646 = vsub.s32 0, %v645
    %v647 = vrot.slane %v643, %v646
    %v664 = vunpack.c.l.b16 %v627
    %v665 = vunpack.c.l.b16 %v628
    %v666 = vunpack.c.l.b16 %v629
    %v667 = vunpack.c.l.b16 %v630
    %v668 = vunpack.c.l.b16 %v631
    %v669 = vunpack.c.l.b16 %v632
    %v670 = vunpack.c.l.b16 %v633
    %v671 = vunpack.c.l.b16 %v634
    %v672 = vunpack.c.l.b16 %v635
    %v673 = vunpack.c.l.b16 %v636
    %v674 = vunpack.c.l.b16 %v637
    %v675 = vunpack.c.l.b16 %v638
    %v676 = vunpack.c.l.b16 %v639
    %v677 = vunpack.c.l.b16 %v640
    %v678 = vunpack.c.l.b16 %v641
    %v679 = vunpack.c.l.b16 %v642
    %v680 = vpack.c.b16 %v665, %v664
    %v681 = vpack.c.b16 %v667, %v666
    %v682 = vpack.c.b16 %v669, %v668
    %v683 = vpack.c.b16 %v671, %v670
    %v684 = vpack.c.b16 %v673, %v672
    %v685 = vpack.c.b16 %v675, %v674
    %v686 = vpack.c.b16 %v677, %v676
    %v687 = vpack.c.b16 %v679, %v678
    %696 = vmatprep.subr.bf16.mxu0 0
    %697 = vmatpush1.bf16.msra.mxu0 %v680
    %698 = vmatprep.subr.bf16.mxu0 0
    %699 = vmatpush1.bf16.msra.mxu0 %v681
    %700 = vmatprep.subr.bf16.mxu0 0
    %701 = vmatpush1.bf16.msra.mxu0 %v682
    %702 = vmatprep.subr.bf16.mxu0 0
    %703 = vmatpush1.bf16.msra.mxu0 %v683
    %704 = vmatprep.subr.bf16.mxu0 0
    %705 = vmatpush1.bf16.msra.mxu0 %v684
    %706 = vmatprep.subr.bf16.mxu0 0
    %707 = vmatpush1.bf16.msra.mxu0 %v685
    %708 = vmatprep.subr.bf16.mxu0 0
    %709 = vmatpush1.bf16.msra.mxu0 %v686
    %710 = vmatprep.subr.bf16.mxu0 0
    %711 = vmatpush1.bf16.msra.mxu0 %v687
    %712 = vmatprep.subr.bf16.mxu0 0
    %713 = vmatpush1.bf16.msra.mxu0 0
    %714 = vmatprep.subr.bf16.mxu0 0
    %715 = vmatpush1.bf16.msra.mxu0 0
    %716 = vmatprep.subr.bf16.mxu0 0
    %717 = vmatpush1.bf16.msra.mxu0 0
    %718 = vmatprep.subr.bf16.mxu0 0
    %719 = vmatpush1.bf16.msra.mxu0 0
    %720 = vmatprep.subr.bf16.mxu0 0
    %721 = vmatpush1.bf16.msra.mxu0 0
    %722 = vmatprep.subr.bf16.mxu0 0
    %723 = vmatpush1.bf16.msra.mxu0 0
    %724 = vmatprep.subr.bf16.mxu0 0
    %725 = vmatpush1.bf16.msra.mxu0 0
    %726 = vmatprep.subr.bf16.mxu0 0
    %727 = vmatpush1.bf16.msra.mxu0 0
    %728 = vmatprep.mubr.bf16.mxu0 0
    %729 = vmatmul.mubr.bf16.gmra.mrb[0].mxu0 %v626
    %v730 = vpop.f32.mrb[0].mxu0
    %v731 = vadd.f32 %v647, %v730
    %v732 = vpop.f32.mrb[0].mxu0
    %v733 = vpop.f32.mrb[0].mxu0
    %v734 = vpop.f32.mrb[0].mxu0
    %735 = vdwg.mxu0
    %v736 = vld [vmem:[%s2] sm:$0xff]
    %v737 = vld [vmem:[%s2 + $0x8] sm:$0xff]
    %v738 = vld [vmem:[%s2 + $0x10] sm:$0xff]
    %v739 = vld [vmem:[%s2 + $0x18] sm:$0xff]
    %v740 = vld [vmem:[%s2 + $0x20] sm:$0xff]
    %v741 = vld [vmem:[%s2 + $0x28] sm:$0xff]
    %v742 = vld [vmem:[%s2 + $0x30] sm:$0xff]
    %v743 = vld [vmem:[%s2 + $0x38] sm:$0xff]
    %v745 = vcombine.high %v731, %v731
    %v747 = vunpack.c.l.s4 1966171168
    %v748 = vunpack.c.0.s8 %v747
    %v749 = vlaneseq
    %v750 = vshrl.u32 %v749, 7
    %v751 = vsub.s32 %v748, %v750
    %v752 = vrot.slane %v731, %v751
    %v754 = vunpack.c.l.s4 1966171168
    %v755 = vunpack.c.0.s8 %v754
    %v756 = vlaneseq
    %v757 = vshrl.u32 %v756, 7
    %v758 = vsub.s32 %v755, %v757
    %v759 = vrot.slane %v745, %v758
    %v760 = vcombine.high %v752, %v752
    %v761 = vcombine.high %v759, %v759
    %v763 = vunpack.c.l.s4 1966171168
    %v764 = vunpack.c.0.s8 %v763
    %v765 = vlaneseq
    %v766 = vshrl.u32 %v765, 7
    %v767 = vsub.s32 %v764, %v766
    %v768 = vrot.slane %v752, %v767
    %v770 = vunpack.c.l.s4 1966171168
    %v771 = vunpack.c.0.s8 %v770
    %v772 = vlaneseq
    %v773 = vshrl.u32 %v772, 7
    %v774 = vsub.s32 %v771, %v773
    %v775 = vrot.slane %v759, %v774
    %v777 = vunpack.c.l.s4 1966171168
    %v778 = vunpack.c.0.s8 %v777
    %v779 = vlaneseq
    %v780 = vshrl.u32 %v779, 7
    %v781 = vsub.s32 %v778, %v780
    %v782 = vrot.slane %v760, %v781
    %v784 = vunpack.c.l.s4 1966171168
    %v785 = vunpack.c.0.s8 %v784
    %v786 = vlaneseq
    %v787 = vshrl.u32 %v786, 7
    %v788 = vsub.s32 %v785, %v787
    %v789 = vrot.slane %v761, %v788
    %v790 = vcombine.high %v768, %v768
    %v791 = vcombine.high %v775, %v775
    %v792 = vcombine.high %v782, %v782
    %v793 = vcombine.high %v789, %v789
    %v794 = vlaneseq
    %v795 = vshrl.u32 %v794, 7
    %v796 = vsub.s32 0, %v795
    %v797 = vrot.slane %v768, %v796
    %v798 = vlaneseq
    %v799 = vshrl.u32 %v798, 7
    %v800 = vsub.s32 0, %v799
    %v801 = vrot.slane %v782, %v800
    %v802 = vlaneseq
    %v803 = vshrl.u32 %v802, 7
    %v804 = vsub.s32 0, %v803
    %v805 = vrot.slane %v790, %v804
    %v806 = vlaneseq
    %v807 = vshrl.u32 %v806, 7
    %v808 = vsub.s32 0, %v807
    %v809 = vrot.slane %v792, %v808
    %v810 = vlaneseq
    %v811 = vshrl.u32 %v810, 7
    %v812 = vsub.s32 0, %v811
    %v813 = vrot.slane %v775, %v812
    %v814 = vlaneseq
    %v815 = vshrl.u32 %v814, 7
    %v816 = vsub.s32 0, %v815
    %v817 = vrot.slane %v789, %v816
    %v818 = vlaneseq
    %v819 = vshrl.u32 %v818, 7
    %v820 = vsub.s32 0, %v819
    %v821 = vrot.slane %v791, %v820
    %v822 = vlaneseq
    %v823 = vshrl.u32 %v822, 7
    %v824 = vsub.s32 0, %v823
    %v825 = vrot.slane %v793, %v824
    %v834 = vmul.f32 %v797, %v736
    %v835 = vmul.f32 %v801, %v737
    %v836 = vmul.f32 %v805, %v738
    %v837 = vmul.f32 %v809, %v739
    %v838 = vmul.f32 %v813, %v740
    %v839 = vmul.f32 %v817, %v741
    %v840 = vmul.f32 %v821, %v742
    %v841 = vmul.f32 %v825, %v743
    %842 = vadd.xlane.f32.xlu0 %v834
    %v843 = vpop.xlane.xlu0 %842
    %844 = vadd.xlane.f32.xlu0 %v835
    %v845 = vpop.xlane.xlu0 %844
    %846 = vadd.xlane.f32.xlu0 %v836
    %v847 = vpop.xlane.xlu0 %846
    %848 = vadd.xlane.f32.xlu0 %v837
    %v849 = vpop.xlane.xlu0 %848
    %850 = vadd.xlane.f32.xlu0 %v838
    %v851 = vpop.xlane.xlu0 %850
    %852 = vadd.xlane.f32.xlu0 %v839
    %v853 = vpop.xlane.xlu0 %852
    %854 = vadd.xlane.f32.xlu0 %v840
    %v855 = vpop.xlane.xlu0 %854
    %856 = vadd.xlane.f32.xlu0 %v841
    %v857 = vpop.xlane.xlu0 %856
    %v858 = vld [vmem:[%s3] sm:$0xff]
    %v860 = vlaneseq
    %v861 = vshrl.u32 %v860, 7
    %v862 = vsub.s32 0, %v861
    %v863 = vrot.slane %v858, %v862
    %865 = vbcast.lane.b32.xlu0 %v863, 256
    %v866 = vpop.permute.xlu0 %865
    %v867 = vlaneseq
    %v868 = vshrl.u32 %v867, 7
    %v869 = vsub.s32 1, %v868
    %v870 = vrot.slane %v858, %v869
    %872 = vbcast.lane.b32.xlu0 %v870, 256
    %v873 = vpop.permute.xlu0 %872
    %v874 = vlaneseq
    %v875 = vshrl.u32 %v874, 7
    %v876 = vsub.s32 2, %v875
    %v877 = vrot.slane %v858, %v876
    %879 = vbcast.lane.b32.xlu0 %v877, 256
    %v880 = vpop.permute.xlu0 %879
    %v881 = vlaneseq
    %v882 = vshrl.u32 %v881, 7
    %v883 = vsub.s32 3, %v882
    %v884 = vrot.slane %v858, %v883
    %886 = vbcast.lane.b32.xlu0 %v884, 256
    %v887 = vpop.permute.xlu0 %886
    %v888 = vlaneseq
    %v889 = vshrl.u32 %v888, 7
    %v890 = vsub.s32 4, %v889
    %v891 = vrot.slane %v858, %v890
    %893 = vbcast.lane.b32.xlu0 %v891, 256
    %v894 = vpop.permute.xlu0 %893
    %v895 = vlaneseq
    %v896 = vshrl.u32 %v895, 7
    %v897 = vsub.s32 5, %v896
    %v898 = vrot.slane %v858, %v897
    %900 = vbcast.lane.b32.xlu0 %v898, 256
    %v901 = vpop.permute.xlu0 %900
    %v902 = vlaneseq
    %v903 = vshrl.u32 %v902, 7
    %v904 = vsub.s32 6, %v903
    %v905 = vrot.slane %v858, %v904
    %907 = vbcast.lane.b32.xlu0 %v905, 256
    %v908 = vpop.permute.xlu0 %907
    %v909 = vlaneseq
    %v910 = vshrl.u32 %v909, 7
    %v911 = vsub.s32 7, %v910
    %v912 = vrot.slane %v858, %v911
    %914 = vbcast.lane.b32.xlu0 %v912, 256
    %v915 = vpop.permute.xlu0 %914
    %v924 = vadd.f32 %v843, %v866
    %v925 = vadd.f32 %v845, %v873
    %v926 = vadd.f32 %v847, %v880
    %v927 = vadd.f32 %v849, %v887
    %v928 = vadd.f32 %v851, %v894
    %v929 = vadd.f32 %v853, %v901
    %v930 = vadd.f32 %v855, %v908
    %v931 = vadd.f32 %v857, %v915
    %940 = vset.pattern.permute.xlu0 0
    %941 = vperm.xlu0 %940, %v924
    %v942 = vpop.permute.xlu0 %941
    %943 = vset.pattern.permute.xlu0 0
    %944 = vperm.xlu0 %943, %v925
    %v945 = vpop.permute.xlu0 %944
    %946 = vset.pattern.permute.xlu0 0
    %947 = vperm.xlu0 %946, %v926
    %v948 = vpop.permute.xlu0 %947
    %949 = vset.pattern.permute.xlu0 0
    %950 = vperm.xlu0 %949, %v927
    %v951 = vpop.permute.xlu0 %950
    %952 = vset.pattern.permute.xlu0 0
    %953 = vperm.xlu0 %952, %v928
    %v954 = vpop.permute.xlu0 %953
    %955 = vset.pattern.permute.xlu0 0
    %956 = vperm.xlu0 %955, %v929
    %v957 = vpop.permute.xlu0 %956
    %958 = vset.pattern.permute.xlu0 0
    %959 = vperm.xlu0 %958, %v930
    %v960 = vpop.permute.xlu0 %959
    %961 = vset.pattern.permute.xlu0 0
    %962 = vperm.xlu0 %961, %v931
    %v963 = vpop.permute.xlu0 %962
    %v964 = vlaneseq
    %v965 = vand.u32 %v964, 127
    %v966 = vlaneseq
    %v967 = vshrl.u32 %v966, 7
    %v968 = vsub.s32 %v965, %v967
    %v969 = vrot.slane %v942, %v968
    %v970 = vlaneseq
    %v971 = vshrl.u32 %v970, 7
    %v972 = vsub.s32 %v965, %v971
    %v973 = vrot.slane %v945, %v972
    %v974 = vlaneseq
    %v975 = vshrl.u32 %v974, 7
    %v976 = vsub.s32 %v965, %v975
    %v977 = vrot.slane %v948, %v976
    %v978 = vlaneseq
    %v979 = vshrl.u32 %v978, 7
    %v980 = vsub.s32 %v965, %v979
    %v981 = vrot.slane %v951, %v980
    %v982 = vlaneseq
    %v983 = vshrl.u32 %v982, 7
    %v984 = vsub.s32 %v965, %v983
    %v985 = vrot.slane %v954, %v984
    %v986 = vlaneseq
    %v987 = vshrl.u32 %v986, 7
    %v988 = vsub.s32 %v965, %v987
    %v989 = vrot.slane %v957, %v988
    %v990 = vlaneseq
    %v991 = vshrl.u32 %v990, 7
    %v992 = vsub.s32 %v965, %v991
    %v993 = vrot.slane %v960, %v992
    %v994 = vlaneseq
    %v995 = vshrl.u32 %v994, 7
    %v996 = vsub.s32 %v965, %v995
    %v997 = vrot.slane %v963, %v996
    %vm998 = vcmask 1041409
    %v999 = vsel %vm998, %v973, %v969
    %vm1000 = vcmask 1042434
    %v1001 = vsel %vm1000, %v977, %v999
    %vm1002 = vcmask 1043459
    %v1003 = vsel %vm1002, %v981, %v1001
    %vm1004 = vcmask 1044484
    %v1005 = vsel %vm1004, %v985, %v1003
    %vm1006 = vcmask 1045509
    %v1007 = vsel %vm1006, %v989, %v1005
    %vm1008 = vcmask 1046534
    %v1009 = vsel %vm1008, %v993, %v1007
    %vm1010 = vcmask 1047559
    %v1011 = vsel %vm1010, %v997, %v1009
    %vm1013 = vcmask 64512
    %v1014 = vsel %vm1013, %v1011, -inf
    %1015 = vmax.xlane.f32.xlu0 %v1014
    %v1016 = vpop.xlane.xlu0 %1015
    %v1018 = vlaneseq
    %v1019 = vshrl.u32 %v1018, 7
    %v1020 = vsub.s32 0, %v1019
    %v1021 = vrot.slane %v1016, %v1020
    %v1022 = vlaneseq
    %v1023 = vshrl.u32 %v1022, 7
    %v1024 = vsub.s32 1, %v1023
    %v1025 = vrot.slane %v1016, %v1024
    %v1026 = vlaneseq
    %v1027 = vshrl.u32 %v1026, 7
    %v1028 = vsub.s32 2, %v1027
    %v1029 = vrot.slane %v1016, %v1028
    %v1030 = vlaneseq
    %v1031 = vshrl.u32 %v1030, 7
    %v1032 = vsub.s32 3, %v1031
    %v1033 = vrot.slane %v1016, %v1032
    %v1034 = vlaneseq
    %v1035 = vshrl.u32 %v1034, 7
    %v1036 = vsub.s32 4, %v1035
    %v1037 = vrot.slane %v1016, %v1036
    %v1038 = vlaneseq
    %v1039 = vshrl.u32 %v1038, 7
    %v1040 = vsub.s32 5, %v1039
    %v1041 = vrot.slane %v1016, %v1040
    %v1042 = vlaneseq
    %v1043 = vshrl.u32 %v1042, 7
    %v1044 = vsub.s32 6, %v1043
    %v1045 = vrot.slane %v1016, %v1044
    %v1046 = vlaneseq
    %v1047 = vshrl.u32 %v1046, 7
    %v1048 = vsub.s32 7, %v1047
    %v1049 = vrot.slane %v1016, %v1048
    %v1058 = vsub.f32 %v924, %v1021
    %v1059 = vsub.f32 %v925, %v1025
    %v1060 = vsub.f32 %v926, %v1029
    %v1061 = vsub.f32 %v927, %v1033
    %v1062 = vsub.f32 %v928, %v1037
    %v1063 = vsub.f32 %v929, %v1041
    %v1064 = vsub.f32 %v930, %v1045
    %v1065 = vsub.f32 %v931, %v1049
    %v1066 = vmul.f32 %v1058, 1.442695
    %v1067 = vpow.pop %v1066
    %v1068 = vmul.f32 %v1059, 1.442695
    %v1069 = vpow.pop %v1068
    %v1070 = vmul.f32 %v1060, 1.442695
    %v1071 = vpow.pop %v1070
    %v1072 = vmul.f32 %v1061, 1.442695
    %v1073 = vpow.pop %v1072
    %v1074 = vmul.f32 %v1062, 1.442695
    %v1075 = vpow.pop %v1074
    %v1076 = vmul.f32 %v1063, 1.442695
    %v1077 = vpow.pop %v1076
    %v1078 = vmul.f32 %v1064, 1.442695
    %v1079 = vpow.pop %v1078
    %v1080 = vmul.f32 %v1065, 1.442695
    %v1081 = vpow.pop %v1080
    %1090 = vset.pattern.permute.xlu0 0
    %1091 = vperm.xlu0 %1090, %v1067
    %v1092 = vpop.permute.xlu0 %1091
    %1093 = vset.pattern.permute.xlu0 0
    %1094 = vperm.xlu0 %1093, %v1069
    %v1095 = vpop.permute.xlu0 %1094
    %1096 = vset.pattern.permute.xlu0 0
    %1097 = vperm.xlu0 %1096, %v1071
    %v1098 = vpop.permute.xlu0 %1097
    %1099 = vset.pattern.permute.xlu0 0
    %1100 = vperm.xlu0 %1099, %v1073
    %v1101 = vpop.permute.xlu0 %1100
    %1102 = vset.pattern.permute.xlu0 0
    %1103 = vperm.xlu0 %1102, %v1075
    %v1104 = vpop.permute.xlu0 %1103
    %1105 = vset.pattern.permute.xlu0 0
    %1106 = vperm.xlu0 %1105, %v1077
    %v1107 = vpop.permute.xlu0 %1106
    %1108 = vset.pattern.permute.xlu0 0
    %1109 = vperm.xlu0 %1108, %v1079
    %v1110 = vpop.permute.xlu0 %1109
    %1111 = vset.pattern.permute.xlu0 0
    %1112 = vperm.xlu0 %1111, %v1081
    %v1113 = vpop.permute.xlu0 %1112
    %v1114 = vlaneseq
    %v1115 = vshrl.u32 %v1114, 7
    %v1116 = vsub.s32 %v965, %v1115
    %v1117 = vrot.slane %v1092, %v1116
    %v1118 = vlaneseq
    %v1119 = vshrl.u32 %v1118, 7
    %v1120 = vsub.s32 %v965, %v1119
    %v1121 = vrot.slane %v1095, %v1120
    %v1122 = vlaneseq
    %v1123 = vshrl.u32 %v1122, 7
    %v1124 = vsub.s32 %v965, %v1123
    %v1125 = vrot.slane %v1098, %v1124
    %v1126 = vlaneseq
    %v1127 = vshrl.u32 %v1126, 7
    %v1128 = vsub.s32 %v965, %v1127
    %v1129 = vrot.slane %v1101, %v1128
    %v1130 = vlaneseq
    %v1131 = vshrl.u32 %v1130, 7
    %v1132 = vsub.s32 %v965, %v1131
    %v1133 = vrot.slane %v1104, %v1132
    %v1134 = vlaneseq
    %v1135 = vshrl.u32 %v1134, 7
    %v1136 = vsub.s32 %v965, %v1135
    %v1137 = vrot.slane %v1107, %v1136
    %v1138 = vlaneseq
    %v1139 = vshrl.u32 %v1138, 7
    %v1140 = vsub.s32 %v965, %v1139
    %v1141 = vrot.slane %v1110, %v1140
    %v1142 = vlaneseq
    %v1143 = vshrl.u32 %v1142, 7
    %v1144 = vsub.s32 %v965, %v1143
    %v1145 = vrot.slane %v1113, %v1144
    %v1146 = vsel %vm998, %v1121, %v1117
    %v1147 = vsel %vm1000, %v1125, %v1146
    %v1148 = vsel %vm1002, %v1129, %v1147
    %v1149 = vsel %vm1004, %v1133, %v1148
    %v1150 = vsel %vm1006, %v1137, %v1149
    %v1151 = vsel %vm1008, %v1141, %v1150
    %v1152 = vsel %vm1010, %v1145, %v1151
    %v1154 = vsel %vm1013, %v1152, 0.0
    %1155 = vadd.xlane.f32.xlu0 %v1154
    %v1156 = vpop.xlane.xlu0 %1155
    %v1157 = vrcp.pop %v1156
    %v1159 = vlaneseq
    %v1160 = vshrl.u32 %v1159, 7
    %v1161 = vsub.s32 0, %v1160
    %v1162 = vrot.slane %v1157, %v1161
    %v1163 = vlaneseq
    %v1164 = vshrl.u32 %v1163, 7
    %v1165 = vsub.s32 1, %v1164
    %v1166 = vrot.slane %v1157, %v1165
    %v1167 = vlaneseq
    %v1168 = vshrl.u32 %v1167, 7
    %v1169 = vsub.s32 2, %v1168
    %v1170 = vrot.slane %v1157, %v1169
    %v1171 = vlaneseq
    %v1172 = vshrl.u32 %v1171, 7
    %v1173 = vsub.s32 3, %v1172
    %v1174 = vrot.slane %v1157, %v1173
    %v1175 = vlaneseq
    %v1176 = vshrl.u32 %v1175, 7
    %v1177 = vsub.s32 4, %v1176
    %v1178 = vrot.slane %v1157, %v1177
    %v1179 = vlaneseq
    %v1180 = vshrl.u32 %v1179, 7
    %v1181 = vsub.s32 5, %v1180
    %v1182 = vrot.slane %v1157, %v1181
    %v1183 = vlaneseq
    %v1184 = vshrl.u32 %v1183, 7
    %v1185 = vsub.s32 6, %v1184
    %v1186 = vrot.slane %v1157, %v1185
    %v1187 = vlaneseq
    %v1188 = vshrl.u32 %v1187, 7
    %v1189 = vsub.s32 7, %v1188
    %v1190 = vrot.slane %v1157, %v1189
    %v1199 = vmul.f32 %v1067, %v1162
    %v1200 = vmul.f32 %v1069, %v1166
    %v1201 = vmul.f32 %v1071, %v1170
    %v1202 = vmul.f32 %v1073, %v1174
    %v1203 = vmul.f32 %v1075, %v1178
    %v1204 = vmul.f32 %v1077, %v1182
    %v1205 = vmul.f32 %v1079, %v1186
    %v1206 = vmul.f32 %v1081, %v1190
    %1215 = vset.pattern.permute.xlu0 0
    %1216 = vperm.xlu0 %1215, %v1199
    %v1217 = vpop.permute.xlu0 %1216
    %1218 = vset.pattern.permute.xlu0 0
    %1219 = vperm.xlu0 %1218, %v1200
    %v1220 = vpop.permute.xlu0 %1219
    %1221 = vset.pattern.permute.xlu0 0
    %1222 = vperm.xlu0 %1221, %v1201
    %v1223 = vpop.permute.xlu0 %1222
    %1224 = vset.pattern.permute.xlu0 0
    %1225 = vperm.xlu0 %1224, %v1202
    %v1226 = vpop.permute.xlu0 %1225
    %1227 = vset.pattern.permute.xlu0 0
    %1228 = vperm.xlu0 %1227, %v1203
    %v1229 = vpop.permute.xlu0 %1228
    %1230 = vset.pattern.permute.xlu0 0
    %1231 = vperm.xlu0 %1230, %v1204
    %v1232 = vpop.permute.xlu0 %1231
    %1233 = vset.pattern.permute.xlu0 0
    %1234 = vperm.xlu0 %1233, %v1205
    %v1235 = vpop.permute.xlu0 %1234
    %1236 = vset.pattern.permute.xlu0 0
    %1237 = vperm.xlu0 %1236, %v1206
    %v1238 = vpop.permute.xlu0 %1237
    %v1239 = vlaneseq
    %v1240 = vshrl.u32 %v1239, 7
    %v1241 = vsub.s32 %v965, %v1240
    %v1242 = vrot.slane %v1217, %v1241
    %v1243 = vlaneseq
    %v1244 = vshrl.u32 %v1243, 7
    %v1245 = vsub.s32 %v965, %v1244
    %v1246 = vrot.slane %v1220, %v1245
    %v1247 = vlaneseq
    %v1248 = vshrl.u32 %v1247, 7
    %v1249 = vsub.s32 %v965, %v1248
    %v1250 = vrot.slane %v1223, %v1249
    %v1251 = vlaneseq
    %v1252 = vshrl.u32 %v1251, 7
    %v1253 = vsub.s32 %v965, %v1252
    %v1254 = vrot.slane %v1226, %v1253
    %v1255 = vlaneseq
    %v1256 = vshrl.u32 %v1255, 7
    %v1257 = vsub.s32 %v965, %v1256
    %v1258 = vrot.slane %v1229, %v1257
    %v1259 = vlaneseq
    %v1260 = vshrl.u32 %v1259, 7
    %v1261 = vsub.s32 %v965, %v1260
    %v1262 = vrot.slane %v1232, %v1261
    %v1263 = vlaneseq
    %v1264 = vshrl.u32 %v1263, 7
    %v1265 = vsub.s32 %v965, %v1264
    %v1266 = vrot.slane %v1235, %v1265
    %v1267 = vlaneseq
    %v1268 = vshrl.u32 %v1267, 7
    %v1269 = vsub.s32 %v965, %v1268
    %v1270 = vrot.slane %v1238, %v1269
    %v1271 = vsel %vm998, %v1246, %v1242
    %v1272 = vsel %vm1000, %v1250, %v1271
    %v1273 = vsel %vm1002, %v1254, %v1272
    %v1274 = vsel %vm1004, %v1258, %v1273
    %v1275 = vsel %vm1006, %v1262, %v1274
    %v1276 = vsel %vm1008, %v1266, %v1275
    %v1277 = vsel %vm1010, %v1270, %v1276
    %1279 = vst.msk [vmem:[%s11] sm:$0xff] %vm1013, %v1277
    %v1288 = vmul.f32 %v1217, %v736
    %v1289 = vmul.f32 %v1220, %v737
    %v1290 = vmul.f32 %v1223, %v738
    %v1291 = vmul.f32 %v1226, %v739
    %v1292 = vmul.f32 %v1229, %v740
    %v1293 = vmul.f32 %v1232, %v741
    %v1294 = vmul.f32 %v1235, %v742
    %v1295 = vmul.f32 %v1238, %v743
    %v1296 = vrot.slane %v1288, 4
    %v1297 = vadd.f32 %v1288, %v1296
    %v1298 = vrot.slane %v1297, 2
    %v1299 = vadd.f32 %v1297, %v1298
    %v1300 = vrot.slane %v1299, 1
    %v1301 = vadd.f32 %v1299, %v1300
    %v1302 = vrot.slane %v1289, 4
    %v1303 = vadd.f32 %v1289, %v1302
    %v1304 = vrot.slane %v1303, 2
    %v1305 = vadd.f32 %v1303, %v1304
    %v1306 = vrot.slane %v1305, 1
    %v1307 = vadd.f32 %v1305, %v1306
    %v1308 = vrot.slane %v1290, 4
    %v1309 = vadd.f32 %v1290, %v1308
    %v1310 = vrot.slane %v1309, 2
    %v1311 = vadd.f32 %v1309, %v1310
    %v1312 = vrot.slane %v1311, 1
    %v1313 = vadd.f32 %v1311, %v1312
    %v1314 = vrot.slane %v1291, 4
    %v1315 = vadd.f32 %v1291, %v1314
    %v1316 = vrot.slane %v1315, 2
    %v1317 = vadd.f32 %v1315, %v1316
    %v1318 = vrot.slane %v1317, 1
    %v1319 = vadd.f32 %v1317, %v1318
    %v1320 = vrot.slane %v1292, 4
    %v1321 = vadd.f32 %v1292, %v1320
    %v1322 = vrot.slane %v1321, 2
    %v1323 = vadd.f32 %v1321, %v1322
    %v1324 = vrot.slane %v1323, 1
    %v1325 = vadd.f32 %v1323, %v1324
    %v1326 = vrot.slane %v1293, 4
    %v1327 = vadd.f32 %v1293, %v1326
    %v1328 = vrot.slane %v1327, 2
    %v1329 = vadd.f32 %v1327, %v1328
    %v1330 = vrot.slane %v1329, 1
    %v1331 = vadd.f32 %v1329, %v1330
    %v1332 = vrot.slane %v1294, 4
    %v1333 = vadd.f32 %v1294, %v1332
    %v1334 = vrot.slane %v1333, 2
    %v1335 = vadd.f32 %v1333, %v1334
    %v1336 = vrot.slane %v1335, 1
    %v1337 = vadd.f32 %v1335, %v1336
    %v1338 = vrot.slane %v1295, 4
    %v1339 = vadd.f32 %v1295, %v1338
    %v1340 = vrot.slane %v1339, 2
    %v1341 = vadd.f32 %v1339, %v1340
    %v1342 = vrot.slane %v1341, 1
    %v1343 = vadd.f32 %v1341, %v1342
    %v1352 = vsel %vm998, %v1307, %v1301
    %v1353 = vsel %vm1000, %v1313, %v1352
    %v1354 = vsel %vm1002, %v1319, %v1353
    %v1355 = vsel %vm1004, %v1325, %v1354
    %v1356 = vsel %vm1006, %v1331, %v1355
    %v1357 = vsel %vm1008, %v1337, %v1356
    %v1358 = vsel %vm1010, %v1343, %v1357
    %v1360 = vpack.c.bf16 %v1358, %v1358
    %v1361 = vld [vmem:[%s5 + $0x40] sm:$0xf]
    %v1362 = vld [vmem:[%s5 + $0x44] sm:$0xf]
    %v1363 = vld [vmem:[%s5 + $0x48] sm:$0xf]
    %v1364 = vld [vmem:[%s5 + $0x4c] sm:$0xf]
    %v1365 = vld [vmem:[%s5 + $0x50] sm:$0xf]
    %v1366 = vld [vmem:[%s5 + $0x54] sm:$0xf]
    %v1367 = vld [vmem:[%s5 + $0x58] sm:$0xf]
    %v1368 = vld [vmem:[%s5 + $0x5c] sm:$0xf]
    %v1369 = vld [vmem:[%s5 + $0x60] sm:$0xf]
    %v1370 = vld [vmem:[%s5 + $0x64] sm:$0xf]
    %v1371 = vld [vmem:[%s5 + $0x68] sm:$0xf]
    %v1372 = vld [vmem:[%s5 + $0x6c] sm:$0xf]
    %v1373 = vld [vmem:[%s5 + $0x70] sm:$0xf]
    %v1374 = vld [vmem:[%s5 + $0x74] sm:$0xf]
    %v1375 = vld [vmem:[%s5 + $0x78] sm:$0xf]
    %v1376 = vld [vmem:[%s5 + $0x7c] sm:$0xf]
    %v1377 = vld [vmem:[%s5 + $0x80] sm:$0xf]
    %v1378 = vld [vmem:[%s5 + $0x84] sm:$0xf]
    %v1379 = vld [vmem:[%s5 + $0x88] sm:$0xf]
    %v1380 = vld [vmem:[%s5 + $0x8c] sm:$0xf]
    %v1381 = vld [vmem:[%s5 + $0x90] sm:$0xf]
    %v1382 = vld [vmem:[%s5 + $0x94] sm:$0xf]
    %v1383 = vld [vmem:[%s5 + $0x98] sm:$0xf]
    %v1384 = vld [vmem:[%s5 + $0x9c] sm:$0xf]
    %v1385 = vld [vmem:[%s5 + $0xa0] sm:$0xf]
    %v1386 = vld [vmem:[%s5 + $0xa4] sm:$0xf]
    %v1387 = vld [vmem:[%s5 + $0xa8] sm:$0xf]
    %v1388 = vld [vmem:[%s5 + $0xac] sm:$0xf]
    %v1389 = vld [vmem:[%s5 + $0xb0] sm:$0xf]
    %v1390 = vld [vmem:[%s5 + $0xb4] sm:$0xf]
    %v1391 = vld [vmem:[%s5 + $0xb8] sm:$0xf]
    %v1392 = vld [vmem:[%s5 + $0xbc] sm:$0xf]
    %v1393 = vld [vmem:[%s8 + $0x1] sm:$0x1]
    %v1394 = vlaneseq
    %v1395 = vshrl.u32 %v1394, 7
    %v1396 = vsub.s32 0, %v1395
    %v1397 = vrot.slane %v1393, %v1396
    %v1430 = vunpack.c.l.b16 %v1361
    %v1431 = vunpack.c.l.b16 %v1362
    %v1432 = vunpack.c.l.b16 %v1363
    %v1433 = vunpack.c.l.b16 %v1364
    %v1434 = vunpack.c.l.b16 %v1365
    %v1435 = vunpack.c.l.b16 %v1366
    %v1436 = vunpack.c.l.b16 %v1367
    %v1437 = vunpack.c.l.b16 %v1368
    %v1438 = vunpack.c.l.b16 %v1369
    %v1439 = vunpack.c.l.b16 %v1370
    %v1440 = vunpack.c.l.b16 %v1371
    %v1441 = vunpack.c.l.b16 %v1372
    %v1442 = vunpack.c.l.b16 %v1373
    %v1443 = vunpack.c.l.b16 %v1374
    %v1444 = vunpack.c.l.b16 %v1375
    %v1445 = vunpack.c.l.b16 %v1376
    %v1446 = vunpack.c.l.b16 %v1377
    %v1447 = vunpack.c.l.b16 %v1378
    %v1448 = vunpack.c.l.b16 %v1379
    %v1449 = vunpack.c.l.b16 %v1380
    %v1450 = vunpack.c.l.b16 %v1381
    %v1451 = vunpack.c.l.b16 %v1382
    %v1452 = vunpack.c.l.b16 %v1383
    %v1453 = vunpack.c.l.b16 %v1384
    %v1454 = vunpack.c.l.b16 %v1385
    %v1455 = vunpack.c.l.b16 %v1386
    %v1456 = vunpack.c.l.b16 %v1387
    %v1457 = vunpack.c.l.b16 %v1388
    %v1458 = vunpack.c.l.b16 %v1389
    %v1459 = vunpack.c.l.b16 %v1390
    %v1460 = vunpack.c.l.b16 %v1391
    %v1461 = vunpack.c.l.b16 %v1392
    %v1462 = vpack.c.b16 %v1431, %v1430
    %v1463 = vpack.c.b16 %v1433, %v1432
    %v1464 = vpack.c.b16 %v1435, %v1434
    %v1465 = vpack.c.b16 %v1437, %v1436
    %v1466 = vpack.c.b16 %v1439, %v1438
    %v1467 = vpack.c.b16 %v1441, %v1440
    %v1468 = vpack.c.b16 %v1443, %v1442
    %v1469 = vpack.c.b16 %v1445, %v1444
    %v1470 = vpack.c.b16 %v1447, %v1446
    %v1471 = vpack.c.b16 %v1449, %v1448
    %v1472 = vpack.c.b16 %v1451, %v1450
    %v1473 = vpack.c.b16 %v1453, %v1452
    %v1474 = vpack.c.b16 %v1455, %v1454
    %v1475 = vpack.c.b16 %v1457, %v1456
    %v1476 = vpack.c.b16 %v1459, %v1458
    %v1477 = vpack.c.b16 %v1461, %v1460
    %1494 = vmatprep.subr.bf16.mxu0 0
    %1495 = vmatpush1.bf16.msra.mxu0 %v1462
    %1496 = vmatprep.subr.bf16.mxu0 0
    %1497 = vmatpush1.bf16.msra.mxu0 %v1463
    %1498 = vmatprep.subr.bf16.mxu0 0
    %1499 = vmatpush1.bf16.msra.mxu0 %v1464
    %1500 = vmatprep.subr.bf16.mxu0 0
    %1501 = vmatpush1.bf16.msra.mxu0 %v1465
    %1502 = vmatprep.subr.bf16.mxu0 0
    %1503 = vmatpush1.bf16.msra.mxu0 %v1466
    %1504 = vmatprep.subr.bf16.mxu0 0
    %1505 = vmatpush1.bf16.msra.mxu0 %v1467
    %1506 = vmatprep.subr.bf16.mxu0 0
    %1507 = vmatpush1.bf16.msra.mxu0 %v1468
    %1508 = vmatprep.subr.bf16.mxu0 0
    %1509 = vmatpush1.bf16.msra.mxu0 %v1469
    %1510 = vmatprep.subr.bf16.mxu0 0
    %1511 = vmatpush1.bf16.msra.mxu0 %v1470
    %1512 = vmatprep.subr.bf16.mxu0 0
    %1513 = vmatpush1.bf16.msra.mxu0 %v1471
    %1514 = vmatprep.subr.bf16.mxu0 0
    %1515 = vmatpush1.bf16.msra.mxu0 %v1472
    %1516 = vmatprep.subr.bf16.mxu0 0
    %1517 = vmatpush1.bf16.msra.mxu0 %v1473
    %1518 = vmatprep.subr.bf16.mxu0 0
    %1519 = vmatpush1.bf16.msra.mxu0 %v1474
    %1520 = vmatprep.subr.bf16.mxu0 0
    %1521 = vmatpush1.bf16.msra.mxu0 %v1475
    %1522 = vmatprep.subr.bf16.mxu0 0
    %1523 = vmatpush1.bf16.msra.mxu0 %v1476
    %1524 = vmatprep.subr.bf16.mxu0 0
    %1525 = vmatpush1.bf16.msra.mxu0 %v1477
    %1526 = vmatprep.mubr.bf16.mxu0 %v1360
    %1527 = vmatmul.mubr.bf16.gmra.mrb[0].mxu0 %v626
    %v1528 = vpop.f32.mrb[0].mxu0
    %v1529 = vadd.f32 %v1397, %v1528
    %v1530 = vpop.f32.mrb[0].mxu0
    %v1531 = vpop.f32.mrb[0].mxu0
    %v1532 = vpop.f32.mrb[0].mxu0
    %1533 = vdwg.mxu0
    %v1534 = vtanh.pop %v1529
    %v1535 = vpack.c.bf16 %v1534, %v1534
    %v1536 = vld [vmem:[%s6] sm:$0xf]
    %v1537 = vld [vmem:[%s6 + $0x4] sm:$0xf]
    %v1538 = vld [vmem:[%s6 + $0x8] sm:$0xf]
    %v1539 = vld [vmem:[%s6 + $0xc] sm:$0xf]
    %v1540 = vld [vmem:[%s6 + $0x10] sm:$0xf]
    %v1541 = vld [vmem:[%s6 + $0x14] sm:$0xf]
    %v1542 = vld [vmem:[%s6 + $0x18] sm:$0xf]
    %v1543 = vld [vmem:[%s6 + $0x1c] sm:$0xf]
    %v1544 = vld [vmem:[%s6 + $0x20] sm:$0xf]
    %v1545 = vld [vmem:[%s6 + $0x24] sm:$0xf]
    %v1546 = vld [vmem:[%s6 + $0x28] sm:$0xf]
    %v1547 = vld [vmem:[%s6 + $0x2c] sm:$0xf]
    %v1548 = vld [vmem:[%s6 + $0x30] sm:$0xf]
    %v1549 = vld [vmem:[%s6 + $0x34] sm:$0xf]
    %v1550 = vld [vmem:[%s6 + $0x38] sm:$0xf]
    %v1551 = vld [vmem:[%s6 + $0x3c] sm:$0xf]
    %v1552 = vld [vmem:[#allocation7] sm:$0x1]
    %v1554 = vlaneseq
    %v1555 = vshrl.u32 %v1554, 7
    %v1556 = vsub.s32 0, %v1555
    %v1557 = vrot.slane %v1552, %v1556
    %v1575 = vunpack.c.l.b16 %v1536
    %v1576 = vunpack.c.l.b16 %v1537
    %v1577 = vunpack.c.l.b16 %v1538
    %v1578 = vunpack.c.l.b16 %v1539
    %v1579 = vunpack.c.l.b16 %v1540
    %v1580 = vunpack.c.l.b16 %v1541
    %v1581 = vunpack.c.l.b16 %v1542
    %v1582 = vunpack.c.l.b16 %v1543
    %v1583 = vunpack.c.l.b16 %v1544
    %v1584 = vunpack.c.l.b16 %v1545
    %v1585 = vunpack.c.l.b16 %v1546
    %v1586 = vunpack.c.l.b16 %v1547
    %v1587 = vunpack.c.l.b16 %v1548
    %v1588 = vunpack.c.l.b16 %v1549
    %v1589 = vunpack.c.l.b16 %v1550
    %v1590 = vunpack.c.l.b16 %v1551
    %v1591 = vpack.c.b16 %v1576, %v1575
    %v1592 = vpack.c.b16 %v1578, %v1577
    %v1593 = vpack.c.b16 %v1580, %v1579
    %v1594 = vpack.c.b16 %v1582, %v1581
    %v1595 = vpack.c.b16 %v1584, %v1583
    %v1596 = vpack.c.b16 %v1586, %v1585
    %v1597 = vpack.c.b16 %v1588, %v1587
    %v1598 = vpack.c.b16 %v1590, %v1589
    %1607 = vmatprep.subr.bf16.mxu0 0
    %1608 = vmatpush1.bf16.msra.mxu0 %v1591
    %1609 = vmatprep.subr.bf16.mxu0 0
    %1610 = vmatpush1.bf16.msra.mxu0 %v1592
    %1611 = vmatprep.subr.bf16.mxu0 0
    %1612 = vmatpush1.bf16.msra.mxu0 %v1593
    %1613 = vmatprep.subr.bf16.mxu0 0
    %1614 = vmatpush1.bf16.msra.mxu0 %v1594
    %1615 = vmatprep.subr.bf16.mxu0 0
    %1616 = vmatpush1.bf16.msra.mxu0 %v1595
    %1617 = vmatprep.subr.bf16.mxu0 0
    %1618 = vmatpush1.bf16.msra.mxu0 %v1596
    %1619 = vmatprep.subr.bf16.mxu0 0
    %1620 = vmatpush1.bf16.msra.mxu0 %v1597
    %1621 = vmatprep.subr.bf16.mxu0 0
    %1622 = vmatpush1.bf16.msra.mxu0 %v1598
    %1623 = vmatprep.subr.bf16.mxu0 0
    %1624 = vmatpush1.bf16.msra.mxu0 0
    %1625 = vmatprep.subr.bf16.mxu0 0
    %1626 = vmatpush1.bf16.msra.mxu0 0
    %1627 = vmatprep.subr.bf16.mxu0 0
    %1628 = vmatpush1.bf16.msra.mxu0 0
    %1629 = vmatprep.subr.bf16.mxu0 0
    %1630 = vmatpush1.bf16.msra.mxu0 0
    %1631 = vmatprep.subr.bf16.mxu0 0
    %1632 = vmatpush1.bf16.msra.mxu0 0
    %1633 = vmatprep.subr.bf16.mxu0 0
    %1634 = vmatpush1.bf16.msra.mxu0 0
    %1635 = vmatprep.subr.bf16.mxu0 0
    %1636 = vmatpush1.bf16.msra.mxu0 0
    %1637 = vmatprep.subr.bf16.mxu0 0
    %1638 = vmatpush1.bf16.msra.mxu0 0
    %1639 = vmatprep.mubr.bf16.mxu0 0
    %1640 = vmatmul.mubr.bf16.gmra.mrb[0].mxu0 %v1535
    %v1641 = vpop.f32.mrb[0].mxu0
    %v1642 = vadd.f32 %v1557, %v1641
    %v1643 = vpop.f32.mrb[0].mxu0
    %v1644 = vpop.f32.mrb[0].mxu0
    %v1645 = vpop.f32.mrb[0].mxu0
    %1646 = vdwg.mxu0
    %1647 = vmax.xlane.f32.xlu0 %v1642
    %v1648 = vpop.xlane.xlu0 %1647
    %v1649 = vsub.f32 %v1642, %v1648
    %v1650 = vmul.f32 %v1649, 1.442695
    %v1651 = vpow.pop %v1650
    %1652 = vadd.xlane.f32.xlu0 %v1651
    %v1653 = vpop.xlane.xlu0 %1652
    %v1654 = vlog2.pop %v1653
    %v1655 = vmul.f32 %v1654, 0.6931472
    %v1656 = vadd.f32 %v1655, %v1648
    %v1657 = vsub.f32 %v1642, %v1656
    %1658 = vst [vmem:[%s10] sm:$0xff] %v1657
    // Predicated region
    $region58: #{attn_decoder_decode.1} parent=1 // pred_check
      _
    $region59: #{attn_decoder_decode.1} parent=1 // pred_check_branch
      %1660 = sbr.rel (0) target = $region61
    $region60: #{attn_decoder_decode.1} parent=1 // pred_region
      _
    $region61: #{attn_decoder_decode.1} parent=1 // pred_fallthru
      _
    // Predicated region
    $region62: #{attn_decoder_decode.1} parent=1 // pred_check
      _
    $region63: #{attn_decoder_decode.1} parent=1 // pred_check_branch
      %1662 = sbr.rel (0) target = $region65
    $region64: #{attn_decoder_decode.1} parent=1 // pred_region
      _
    $region65: #{attn_decoder_decode.1} parent=1 // pred_fallthru
      _
    // Predicated region
    $region66: #{attn_decoder_decode.1} parent=1 // pred_check
      _
    $region67: #{attn_decoder_decode.1} parent=1 // pred_check_branch
      %1664 = sbr.rel (0) target = $region69
    $region68: #{attn_decoder_decode.1} parent=1 // pred_region
      _
    $region69: #{attn_decoder_decode.1} parent=1 // pred_fallthru
      _
    // Predicated region
    $region70: #{attn_decoder_decode.1} parent=1 // pred_check
      _
    $region71: #{attn_decoder_decode.1} parent=1 // pred_check_branch
      %1666 = sbr.rel (0) target = $region73
    $region72: #{attn_decoder_decode.1} parent=1 // pred_region
      _
    $region73: #{attn_decoder_decode.1} parent=1 // pred_fallthru
      _
    // Predicated region
    $region74: #{attn_decoder_decode.1} parent=1 // pred_check
      _
    $region75: #{attn_decoder_decode.1} parent=1 // pred_check_branch
      %1668 = sbr.rel (0) target = $region77
    $region76: #{attn_decoder_decode.1} parent=1 // pred_region
      _
    $region77: #{attn_decoder_decode.1} parent=1 // pred_fallthru
      _
    // Predicated region
    $region78: #{attn_decoder_decode.1} parent=1 // pred_check
      _
    $region79: #{attn_decoder_decode.1} parent=1 // pred_check_branch
      %1670 = sbr.rel (0) target = $region81
    $region80: #{attn_decoder_decode.1} parent=1 // pred_region
      _
    $region81: #{attn_decoder_decode.1} parent=1 // pred_fallthru
      _
    %1671 = vsyncpa [#allocation4], 1
    %1672 = vsyncpa [#allocation6], 1

</llo_original>
